<compile_context>
chip_gen: v5e
topology: v5e:2x2
jax: 0.10.0
libtpu: 0.0.40
codegen_flags: <defaults>
</compile_context>

<pallas_src>
import jax
import jax.numpy as jnp
from jax.experimental import pallas as pl
from jax.experimental.pallas import tpu as pltpu

K = 7      # conv kernel size
PAD = 3    # conv padding


def spatial_gate_kernel(x_ref, w_ref, p_ref, o_ref):
    # x_ref: (B, C, H, W)  VMEM  -- B images, NCHW layout
    # w_ref: (2*K*K,)      SMEM  -- flattened conv weight [in_c, kh, kw]
    # p_ref: (2,)          SMEM  -- [affine scale, affine shift]
    # o_ref: (B, H, W)     VMEM  -- channel dim squeezed via BlockSpec
    B, C, H, W = x_ref.shape

    # Load x once; both reductions consume the same value (f32 accumulation).
    x = x_ref[...].astype(jnp.float32)                   # (B, C, H, W)
    pmax = jnp.max(x, axis=1)                            # (B, H, W)
    pmean = jnp.sum(x, axis=1) * jnp.float32(1.0 / C)    # (B, H, W)

    # Folded BN/bias affine -- hoisted scalar reads (broadcast once each).
    scale = p_ref[0]
    shift = p_ref[1]

    # Zero borders for the padded pooled maps, kept as register values.
    zw = jnp.zeros((B, H, PAD), jnp.float32)
    zh = jnp.zeros((B, PAD, W + 2 * PAD), jnp.float32)

    acc = jnp.zeros((B, H, W), jnp.float32)
    for c, pooled in enumerate((pmax, pmean)):
        pw = jnp.concatenate([zw, pooled, zw], axis=2)     # (B, H,   W+6)
        phw = jnp.concatenate([zh, pw, zh], axis=1)        # (B, H+6, W+6)
        for kw in range(K):
            # One lane-direction shift per (c, kw): 14 total, hoisted out of
            # the kh loop.
            s = phw[:, :, kw:kw + W]                       # (B, H+6, W)
            for kh in range(K):
                wgt = w_ref[c * K * K + kh * K + kw]       # SMEM scalar
                acc = acc + wgt * s[:, kh:kh + H, :]       # sublane-offset read

    y = acc * scale + shift
    o_ref[...] = (y * jax.nn.sigmoid(y)).astype(o_ref.dtype)


def _images_per_step(N, C, H, W, itemsize, target_bytes=1 << 20):
    # Largest divisor of N whose input block stays ~<= target_bytes, while
    # keeping at least two grid steps when N >= 2 (v7x: 2 TensorCores/chip).
    # target_bytes is conservative so double-buffered blocks fit the default
    # scoped VMEM budget on v5e/v6e/v7x without raising vmem_limit_bytes.
    per_image = max(1, C * H * W * itemsize)
    cap = max(1, target_bytes // per_image)
    if N >= 2:
        cap = min(cap, N // 2)
    for b in range(min(cap, N), 0, -1):
        if N % b == 0:
            return b
    return 1


def spatial_gate(x, conv_w, conv_b, bn_gamma, bn_beta, bn_mean, bn_var, eps=1e-5):
    N, C, H, W = x.shape
    # Fold BN (eval mode) and conv bias into scale/shift:
    #   y = ((conv + b) - rm) / sqrt(rv + eps) * gamma + beta = conv*scale + shift
    scale = bn_gamma / jnp.sqrt(bn_var + eps)                  # (1,)
    shift = bn_beta - bn_mean * scale + conv_b * scale         # (1,)
    w_flat = conv_w.reshape(-1).astype(jnp.float32)            # (2*7*7,)
    params = jnp.stack([scale[0], shift[0]]).astype(jnp.float32)

    B = _images_per_step(N, C, H, W, x.dtype.itemsize)
    grid = (N // B,)

    return pl.pallas_call(
        spatial_gate_kernel,
        out_shape=jax.ShapeDtypeStruct((N, 1, H, W), x.dtype),
        grid=grid,
        in_specs=[
            pl.BlockSpec((B, C, H, W), lambda n: (n, 0, 0, 0)),
            pl.BlockSpec(memory_space=pltpu.MemorySpace.SMEM),
            pl.BlockSpec(memory_space=pltpu.MemorySpace.SMEM),
        ],
        # Channel dim (size 1) squeezed out of the kernel view.
        out_specs=pl.BlockSpec((B, None, H, W), lambda n: (n, 0, 0, 0)),
        compiler_params=pltpu.CompilerParams(dimension_semantics=("parallel",)),
    )(x, w_flat, params)


def spatial_gate_reference(x, conv_w, conv_b, bn_gamma, bn_beta, bn_mean, bn_var,
                           eps=1e-5):
    # Pure-JAX reference (NCHW), BN in eval mode.
    pmax = jnp.max(x, axis=1, keepdims=True)
    pmean = jnp.mean(x, axis=1, keepdims=True)
    pooled = jnp.concatenate([pmax, pmean], axis=1)            # (N, 2, H, W)
    z = jax.lax.conv_general_dilated(
        pooled, conv_w, window_strides=(1, 1),
        padding=((PAD, PAD), (PAD, PAD)),
        dimension_numbers=("NCHW", "OIHW", "NCHW"),
    ) + conv_b[None, :, None, None]
    scale = bn_gamma / jnp.sqrt(bn_var + eps)
    shift = bn_beta - bn_mean * scale
    y = z * scale[None, :, None, None] + shift[None, :, None, None]
    return y * jax.nn.sigmoid(y)


def _check(key, N, C, H, W):
    k1, k2, k3 = jax.random.split(key, 3)
    x = jax.random.normal(k1, (N, C, H, W), dtype=jnp.float32)
    conv_w = jax.random.normal(k2, (1, 2, K, K), dtype=jnp.float32) * 0.1
    conv_b = jax.random.normal(k3, (1,), dtype=jnp.float32) * 0.1
    bn_gamma = jnp.full((1,), 1.2, jnp.float32)
    bn_beta = jnp.full((1,), -0.1, jnp.float32)
    bn_mean = jnp.full((1,), 0.05, jnp.float32)
    bn_var = jnp.full((1,), 0.9, jnp.float32)

    out = jax.block_until_ready(
        spatial_gate(x, conv_w, conv_b, bn_gamma, bn_beta, bn_mean, bn_var))
    ref = jax.block_until_ready(
        spatial_gate_reference(x, conv_w, conv_b, bn_gamma, bn_beta, bn_mean,
                               bn_var))

    assert out.shape == (N, 1, H, W), out.shape
    assert jnp.allclose(out, ref, atol=3e-5, rtol=3e-5), \
        f"max abs err = {jnp.max(jnp.abs(out - ref))}"


if __name__ == "__main__":
    key = jax.random.PRNGKey(0)
    k_a, k_b = jax.random.split(key)

    # Primary small test (B=1 per step, grid=(2,)).
    _check(k_a, N=2, C=4, H=16, W=16)
    # Exercise the multi-image-per-step path (B=2 per step, grid=(2,)).
    _check(k_b, N=4, C=8, H=16, W=16)

    print("KERNEL_OK")
</pallas_src>

<mosaic_0001>
module attributes {stable_mosaic.version = 11 : i64} {
  func.func @spatial_gate_kernel(%arg0: i32, %arg1: memref<1x4x16x16xf32, #tpu.memory_space<vmem>>, %arg2: memref<98xf32, #tpu.memory_space<smem>>, %arg3: memref<2xf32, #tpu.memory_space<smem>>, %arg4: memref<1x1x16x16xf32, #tpu.memory_space<vmem>>) attributes {dimension_semantics = [#tpu.dimension_semantics<parallel>], iteration_bounds = array<i64: 2>, scalar_prefetch = 0 : i64, scratch_operands = 0 : i64, tpu.core_type = #tpu.core_type<tc>, window_params = [{transform_indices = @transform_0, window_bounds = array<i64: 1, 4, 16, 16>}, {transform_indices = @transform_1, window_bounds = array<i64: 98>}, {transform_indices = @transform_2, window_bounds = array<i64: 2>}, {transform_indices = @transform_3, window_bounds = array<i64: 1, 1, 16, 16>}]} {
    %c0 = arith.constant 0 : index
    %c0_0 = arith.constant 0 : index
    %c0_1 = arith.constant 0 : index
    %c0_2 = arith.constant 0 : index
    %0 = vector.load %arg1[%c0, %c0_0, %c0_1, %c0_2] : memref<1x4x16x16xf32, #tpu.memory_space<vmem>>, vector<1x4x16x16xf32>
    %cst = arith.constant dense<0xFF800000> : vector<1x16x16xf32>
    %1 = vector.multi_reduction <maximumf>, %0, %cst [1] : vector<1x4x16x16xf32> to vector<1x16x16xf32>
    %cst_3 = arith.constant dense<0.000000e+00> : vector<1x16x16xf32>
    %2 = vector.multi_reduction <add>, %0, %cst_3 [1] : vector<1x4x16x16xf32> to vector<1x16x16xf32>
    %cst_4 = arith.constant 2.500000e-01 : f32
    %3 = vector.broadcast %cst_4 : f32 to vector<1x16x16xf32>
    %4 = arith.mulf %2, %3 : vector<1x16x16xf32>
    %c0_5 = arith.constant 0 : index
    %5 = memref.load %arg3[%c0_5] : memref<2xf32, #tpu.memory_space<smem>>
    %c1 = arith.constant 1 : index
    %6 = memref.load %arg3[%c1] : memref<2xf32, #tpu.memory_space<smem>>
    %cst_6 = arith.constant 0.000000e+00 : f32
    %7 = vector.broadcast %cst_6 : f32 to vector<1x16x3xf32>
    %cst_7 = arith.constant 0.000000e+00 : f32
    %8 = vector.broadcast %cst_7 : f32 to vector<1x3x22xf32>
    %cst_8 = arith.constant 0.000000e+00 : f32
    %9 = vector.broadcast %cst_8 : f32 to vector<1x16x16xf32>
    %10 = tpu.concatenate %7, %1, %7 in 2 : vector<1x16x3xf32>, vector<1x16x16xf32>, vector<1x16x3xf32> -> vector<1x16x22xf32>
    %11 = tpu.concatenate %8, %10, %8 in 1 : vector<1x3x22xf32>, vector<1x16x22xf32>, vector<1x3x22xf32> -> vector<1x22x22xf32>
    %12 = vector.extract_strided_slice %11 {offsets = [0, 0, 0], sizes = [1, 22, 16], strides = [1, 1, 1]} : vector<1x22x22xf32> to vector<1x22x16xf32>
    %c0_9 = arith.constant 0 : index
    %13 = memref.load %arg2[%c0_9] : memref<98xf32, #tpu.memory_space<smem>>
    %14 = vector.extract_strided_slice %12 {offsets = [0, 0, 0], sizes = [1, 16, 16], strides = [1, 1, 1]} : vector<1x22x16xf32> to vector<1x16x16xf32>
    %15 = vector.broadcast %13 : f32 to vector<1x16x16xf32>
    %16 = arith.mulf %15, %14 : vector<1x16x16xf32>
    %17 = arith.addf %9, %16 : vector<1x16x16xf32>
    %c7 = arith.constant 7 : index
    %18 = memref.load %arg2[%c7] : memref<98xf32, #tpu.memory_space<smem>>
    %19 = vector.extract_strided_slice %12 {offsets = [0, 1, 0], sizes = [1, 16, 16], strides = [1, 1, 1]} : vector<1x22x16xf32> to vector<1x16x16xf32>
    %20 = vector.broadcast %18 : f32 to vector<1x16x16xf32>
    %21 = arith.mulf %20, %19 : vector<1x16x16xf32>
    %22 = arith.addf %17, %21 : vector<1x16x16xf32>
    %c14 = arith.constant 14 : index
    %23 = memref.load %arg2[%c14] : memref<98xf32, #tpu.memory_space<smem>>
    %24 = vector.extract_strided_slice %12 {offsets = [0, 2, 0], sizes = [1, 16, 16], strides = [1, 1, 1]} : vector<1x22x16xf32> to vector<1x16x16xf32>
    %25 = vector.broadcast %23 : f32 to vector<1x16x16xf32>
    %26 = arith.mulf %25, %24 : vector<1x16x16xf32>
    %27 = arith.addf %22, %26 : vector<1x16x16xf32>
    %c21 = arith.constant 21 : index
    %28 = memref.load %arg2[%c21] : memref<98xf32, #tpu.memory_space<smem>>
    %29 = vector.extract_strided_slice %12 {offsets = [0, 3, 0], sizes = [1, 16, 16], strides = [1, 1, 1]} : vector<1x22x16xf32> to vector<1x16x16xf32>
    %30 = vector.broadcast %28 : f32 to vector<1x16x16xf32>
    %31 = arith.mulf %30, %29 : vector<1x16x16xf32>
    %32 = arith.addf %27, %31 : vector<1x16x16xf32>
    %c28 = arith.constant 28 : index
    %33 = memref.load %arg2[%c28] : memref<98xf32, #tpu.memory_space<smem>>
    %34 = vector.extract_strided_slice %12 {offsets = [0, 4, 0], sizes = [1, 16, 16], strides = [1, 1, 1]} : vector<1x22x16xf32> to vector<1x16x16xf32>
    %35 = vector.broadcast %33 : f32 to vector<1x16x16xf32>
    %36 = arith.mulf %35, %34 : vector<1x16x16xf32>
    %37 = arith.addf %32, %36 : vector<1x16x16xf32>
    %c35 = arith.constant 35 : index
    %38 = memref.load %arg2[%c35] : memref<98xf32, #tpu.memory_space<smem>>
    %39 = vector.extract_strided_slice %12 {offsets = [0, 5, 0], sizes = [1, 16, 16], strides = [1, 1, 1]} : vector<1x22x16xf32> to vector<1x16x16xf32>
    %40 = vector.broadcast %38 : f32 to vector<1x16x16xf32>
    %41 = arith.mulf %40, %39 : vector<1x16x16xf32>
    %42 = arith.addf %37, %41 : vector<1x16x16xf32>
    %c42 = arith.constant 42 : index
    %43 = memref.load %arg2[%c42] : memref<98xf32, #tpu.memory_space<smem>>
    %44 = vector.extract_strided_slice %12 {offsets = [0, 6, 0], sizes = [1, 16, 16], strides = [1, 1, 1]} : vector<1x22x16xf32> to vector<1x16x16xf32>
    %45 = vector.broadcast %43 : f32 to vector<1x16x16xf32>
    %46 = arith.mulf %45, %44 : vector<1x16x16xf32>
    %47 = arith.addf %42, %46 : vector<1x16x16xf32>
    %48 = vector.extract_strided_slice %11 {offsets = [0, 0, 1], sizes = [1, 22, 16], strides = [1, 1, 1]} : vector<1x22x22xf32> to vector<1x22x16xf32>
    %c1_10 = arith.constant 1 : index
    %49 = memref.load %arg2[%c1_10] : memref<98xf32, #tpu.memory_space<smem>>
    %50 = vector.extract_strided_slice %48 {offsets = [0, 0, 0], sizes = [1, 16, 16], strides = [1, 1, 1]} : vector<1x22x16xf32> to vector<1x16x16xf32>
    %51 = vector.broadcast %49 : f32 to vector<1x16x16xf32>
    %52 = arith.mulf %51, %50 : vector<1x16x16xf32>
    %53 = arith.addf %47, %52 : vector<1x16x16xf32>
    %c8 = arith.constant 8 : index
    %54 = memref.load %arg2[%c8] : memref<98xf32, #tpu.memory_space<smem>>
    %55 = vector.extract_strided_slice %48 {offsets = [0, 1, 0], sizes = [1, 16, 16], strides = [1, 1, 1]} : vector<1x22x16xf32> to vector<1x16x16xf32>
    %56 = vector.broadcast %54 : f32 to vector<1x16x16xf32>
    %57 = arith.mulf %56, %55 : vector<1x16x16xf32>
    %58 = arith.addf %53, %57 : vector<1x16x16xf32>
    %c15 = arith.constant 15 : index
    %59 = memref.load %arg2[%c15] : memref<98xf32, #tpu.memory_space<smem>>
    %60 = vector.extract_strided_slice %48 {offsets = [0, 2, 0], sizes = [1, 16, 16], strides = [1, 1, 1]} : vector<1x22x16xf32> to vector<1x16x16xf32>
    %61 = vector.broadcast %59 : f32 to vector<1x16x16xf32>
    %62 = arith.mulf %61, %60 : vector<1x16x16xf32>
    %63 = arith.addf %58, %62 : vector<1x16x16xf32>
    %c22 = arith.constant 22 : index
    %64 = memref.load %arg2[%c22] : memref<98xf32, #tpu.memory_space<smem>>
    %65 = vector.extract_strided_slice %48 {offsets = [0, 3, 0], sizes = [1, 16, 16], strides = [1, 1, 1]} : vector<1x22x16xf32> to vector<1x16x16xf32>
    %66 = vector.broadcast %64 : f32 to vector<1x16x16xf32>
    %67 = arith.mulf %66, %65 : vector<1x16x16xf32>
    %68 = arith.addf %63, %67 : vector<1x16x16xf32>
    %c29 = arith.constant 29 : index
    %69 = memref.load %arg2[%c29] : memref<98xf32, #tpu.memory_space<smem>>
    %70 = vector.extract_strided_slice %48 {offsets = [0, 4, 0], sizes = [1, 16, 16], strides = [1, 1, 1]} : vector<1x22x16xf32> to vector<1x16x16xf32>
    %71 = vector.broadcast %69 : f32 to vector<1x16x16xf32>
    %72 = arith.mulf %71, %70 : vector<1x16x16xf32>
    %73 = arith.addf %68, %72 : vector<1x16x16xf32>
    %c36 = arith.constant 36 : index
    %74 = memref.load %arg2[%c36] : memref<98xf32, #tpu.memory_space<smem>>
    %75 = vector.extract_strided_slice %48 {offsets = [0, 5, 0], sizes = [1, 16, 16], strides = [1, 1, 1]} : vector<1x22x16xf32> to vector<1x16x16xf32>
    %76 = vector.broadcast %74 : f32 to vector<1x16x16xf32>
    %77 = arith.mulf %76, %75 : vector<1x16x16xf32>
    %78 = arith.addf %73, %77 : vector<1x16x16xf32>
    %c43 = arith.constant 43 : index
    %79 = memref.load %arg2[%c43] : memref<98xf32, #tpu.memory_space<smem>>
    %80 = vector.extract_strided_slice %48 {offsets = [0, 6, 0], sizes = [1, 16, 16], strides = [1, 1, 1]} : vector<1x22x16xf32> to vector<1x16x16xf32>
    %81 = vector.broadcast %79 : f32 to vector<1x16x16xf32>
    %82 = arith.mulf %81, %80 : vector<1x16x16xf32>
    %83 = arith.addf %78, %82 : vector<1x16x16xf32>
    %84 = vector.extract_strided_slice %11 {offsets = [0, 0, 2], sizes = [1, 22, 16], strides = [1, 1, 1]} : vector<1x22x22xf32> to vector<1x22x16xf32>
    %c2 = arith.constant 2 : index
    %85 = memref.load %arg2[%c2] : memref<98xf32, #tpu.memory_space<smem>>
    %86 = vector.extract_strided_slice %84 {offsets = [0, 0, 0], sizes = [1, 16, 16], strides = [1, 1, 1]} : vector<1x22x16xf32> to vector<1x16x16xf32>
    %87 = vector.broadcast %85 : f32 to vector<1x16x16xf32>
    %88 = arith.mulf %87, %86 : vector<1x16x16xf32>
    %89 = arith.addf %83, %88 : vector<1x16x16xf32>
    %c9 = arith.constant 9 : index
    %90 = memref.load %arg2[%c9] : memref<98xf32, #tpu.memory_space<smem>>
    %91 = vector.extract_strided_slice %84 {offsets = [0, 1, 0], sizes = [1, 16, 16], strides = [1, 1, 1]} : vector<1x22x16xf32> to vector<1x16x16xf32>
    %92 = vector.broadcast %90 : f32 to vector<1x16x16xf32>
    %93 = arith.mulf %92, %91 : vector<1x16x16xf32>
    %94 = arith.addf %89, %93 : vector<1x16x16xf32>
    %c16 = arith.constant 16 : index
    %95 = memref.load %arg2[%c16] : memref<98xf32, #tpu.memory_space<smem>>
    %96 = vector.extract_strided_slice %84 {offsets = [0, 2, 0], sizes = [1, 16, 16], strides = [1, 1, 1]} : vector<1x22x16xf32> to vector<1x16x16xf32>
    %97 = vector.broadcast %95 : f32 to vector<1x16x16xf32>
    %98 = arith.mulf %97, %96 : vector<1x16x16xf32>
    %99 = arith.addf %94, %98 : vector<1x16x16xf32>
    %c23 = arith.constant 23 : index
    %100 = memref.load %arg2[%c23] : memref<98xf32, #tpu.memory_space<smem>>
    %101 = vector.extract_strided_slice %84 {offsets = [0, 3, 0], sizes = [1, 16, 16], strides = [1, 1, 1]} : vector<1x22x16xf32> to vector<1x16x16xf32>
    %102 = vector.broadcast %100 : f32 to vector<1x16x16xf32>
    %103 = arith.mulf %102, %101 : vector<1x16x16xf32>
    %104 = arith.addf %99, %103 : vector<1x16x16xf32>
    %c30 = arith.constant 30 : index
    %105 = memref.load %arg2[%c30] : memref<98xf32, #tpu.memory_space<smem>>
    %106 = vector.extract_strided_slice %84 {offsets = [0, 4, 0], sizes = [1, 16, 16], strides = [1, 1, 1]} : vector<1x22x16xf32> to vector<1x16x16xf32>
    %107 = vector.broadcast %105 : f32 to vector<1x16x16xf32>
    %108 = arith.mulf %107, %106 : vector<1x16x16xf32>
    %109 = arith.addf %104, %108 : vector<1x16x16xf32>
    %c37 = arith.constant 37 : index
    %110 = memref.load %arg2[%c37] : memref<98xf32, #tpu.memory_space<smem>>
    %111 = vector.extract_strided_slice %84 {offsets = [0, 5, 0], sizes = [1, 16, 16], strides = [1, 1, 1]} : vector<1x22x16xf32> to vector<1x16x16xf32>
    %112 = vector.broadcast %110 : f32 to vector<1x16x16xf32>
    %113 = arith.mulf %112, %111 : vector<1x16x16xf32>
    %114 = arith.addf %109, %113 : vector<1x16x16xf32>
    %c44 = arith.constant 44 : index
    %115 = memref.load %arg2[%c44] : memref<98xf32, #tpu.memory_space<smem>>
    %116 = vector.extract_strided_slice %84 {offsets = [0, 6, 0], sizes = [1, 16, 16], strides = [1, 1, 1]} : vector<1x22x16xf32> to vector<1x16x16xf32>
    %117 = vector.broadcast %115 : f32 to vector<1x16x16xf32>
    %118 = arith.mulf %117, %116 : vector<1x16x16xf32>
    %119 = arith.addf %114, %118 : vector<1x16x16xf32>
    %120 = vector.extract_strided_slice %11 {offsets = [0, 0, 3], sizes = [1, 22, 16], strides = [1, 1, 1]} : vector<1x22x22xf32> to vector<1x22x16xf32>
    %c3 = arith.constant 3 : index
    %121 = memref.load %arg2[%c3] : memref<98xf32, #tpu.memory_space<smem>>
    %122 = vector.extract_strided_slice %120 {offsets = [0, 0, 0], sizes = [1, 16, 16], strides = [1, 1, 1]} : vector<1x22x16xf32> to vector<1x16x16xf32>
    %123 = vector.broadcast %121 : f32 to vector<1x16x16xf32>
    %124 = arith.mulf %123, %122 : vector<1x16x16xf32>
    %125 = arith.addf %119, %124 : vector<1x16x16xf32>
    %c10 = arith.constant 10 : index
    %126 = memref.load %arg2[%c10] : memref<98xf32, #tpu.memory_space<smem>>
    %127 = vector.extract_strided_slice %120 {offsets = [0, 1, 0], sizes = [1, 16, 16], strides = [1, 1, 1]} : vector<1x22x16xf32> to vector<1x16x16xf32>
    %128 = vector.broadcast %126 : f32 to vector<1x16x16xf32>
    %129 = arith.mulf %128, %127 : vector<1x16x16xf32>
    %130 = arith.addf %125, %129 : vector<1x16x16xf32>
    %c17 = arith.constant 17 : index
    %131 = memref.load %arg2[%c17] : memref<98xf32, #tpu.memory_space<smem>>
    %132 = vector.extract_strided_slice %120 {offsets = [0, 2, 0], sizes = [1, 16, 16], strides = [1, 1, 1]} : vector<1x22x16xf32> to vector<1x16x16xf32>
    %133 = vector.broadcast %131 : f32 to vector<1x16x16xf32>
    %134 = arith.mulf %133, %132 : vector<1x16x16xf32>
    %135 = arith.addf %130, %134 : vector<1x16x16xf32>
    %c24 = arith.constant 24 : index
    %136 = memref.load %arg2[%c24] : memref<98xf32, #tpu.memory_space<smem>>
    %137 = vector.extract_strided_slice %120 {offsets = [0, 3, 0], sizes = [1, 16, 16], strides = [1, 1, 1]} : vector<1x22x16xf32> to vector<1x16x16xf32>
    %138 = vector.broadcast %136 : f32 to vector<1x16x16xf32>
    %139 = arith.mulf %138, %137 : vector<1x16x16xf32>
    %140 = arith.addf %135, %139 : vector<1x16x16xf32>
    %c31 = arith.constant 31 : index
    %141 = memref.load %arg2[%c31] : memref<98xf32, #tpu.memory_space<smem>>
    %142 = vector.extract_strided_slice %120 {offsets = [0, 4, 0], sizes = [1, 16, 16], strides = [1, 1, 1]} : vector<1x22x16xf32> to vector<1x16x16xf32>
    %143 = vector.broadcast %141 : f32 to vector<1x16x16xf32>
    %144 = arith.mulf %143, %142 : vector<1x16x16xf32>
    %145 = arith.addf %140, %144 : vector<1x16x16xf32>
    %c38 = arith.constant 38 : index
    %146 = memref.load %arg2[%c38] : memref<98xf32, #tpu.memory_space<smem>>
    %147 = vector.extract_strided_slice %120 {offsets = [0, 5, 0], sizes = [1, 16, 16], strides = [1, 1, 1]} : vector<1x22x16xf32> to vector<1x16x16xf32>
    %148 = vector.broadcast %146 : f32 to vector<1x16x16xf32>
    %149 = arith.mulf %148, %147 : vector<1x16x16xf32>
    %150 = arith.addf %145, %149 : vector<1x16x16xf32>
    %c45 = arith.constant 45 : index
    %151 = memref.load %arg2[%c45] : memref<98xf32, #tpu.memory_space<smem>>
    %152 = vector.extract_strided_slice %120 {offsets = [0, 6, 0], sizes = [1, 16, 16], strides = [1, 1, 1]} : vector<1x22x16xf32> to vector<1x16x16xf32>
    %153 = vector.broadcast %151 : f32 to vector<1x16x16xf32>
    %154 = arith.mulf %153, %152 : vector<1x16x16xf32>
    %155 = arith.addf %150, %154 : vector<1x16x16xf32>
    %156 = vector.extract_strided_slice %11 {offsets = [0, 0, 4], sizes = [1, 22, 16], strides = [1, 1, 1]} : vector<1x22x22xf32> to vector<1x22x16xf32>
    %c4 = arith.constant 4 : index
    %157 = memref.load %arg2[%c4] : memref<98xf32, #tpu.memory_space<smem>>
    %158 = vector.extract_strided_slice %156 {offsets = [0, 0, 0], sizes = [1, 16, 16], strides = [1, 1, 1]} : vector<1x22x16xf32> to vector<1x16x16xf32>
    %159 = vector.broadcast %157 : f32 to vector<1x16x16xf32>
    %160 = arith.mulf %159, %158 : vector<1x16x16xf32>
    %161 = arith.addf %155, %160 : vector<1x16x16xf32>
    %c11 = arith.constant 11 : index
    %162 = memref.load %arg2[%c11] : memref<98xf32, #tpu.memory_space<smem>>
    %163 = vector.extract_strided_slice %156 {offsets = [0, 1, 0], sizes = [1, 16, 16], strides = [1, 1, 1]} : vector<1x22x16xf32> to vector<1x16x16xf32>
    %164 = vector.broadcast %162 : f32 to vector<1x16x16xf32>
    %165 = arith.mulf %164, %163 : vector<1x16x16xf32>
    %166 = arith.addf %161, %165 : vector<1x16x16xf32>
    %c18 = arith.constant 18 : index
    %167 = memref.load %arg2[%c18] : memref<98xf32, #tpu.memory_space<smem>>
    %168 = vector.extract_strided_slice %156 {offsets = [0, 2, 0], sizes = [1, 16, 16], strides = [1, 1, 1]} : vector<1x22x16xf32> to vector<1x16x16xf32>
    %169 = vector.broadcast %167 : f32 to vector<1x16x16xf32>
    %170 = arith.mulf %169, %168 : vector<1x16x16xf32>
    %171 = arith.addf %166, %170 : vector<1x16x16xf32>
    %c25 = arith.constant 25 : index
    %172 = memref.load %arg2[%c25] : memref<98xf32, #tpu.memory_space<smem>>
    %173 = vector.extract_strided_slice %156 {offsets = [0, 3, 0], sizes = [1, 16, 16], strides = [1, 1, 1]} : vector<1x22x16xf32> to vector<1x16x16xf32>
    %174 = vector.broadcast %172 : f32 to vector<1x16x16xf32>
    %175 = arith.mulf %174, %173 : vector<1x16x16xf32>
    %176 = arith.addf %171, %175 : vector<1x16x16xf32>
    %c32 = arith.constant 32 : index
    %177 = memref.load %arg2[%c32] : memref<98xf32, #tpu.memory_space<smem>>
    %178 = vector.extract_strided_slice %156 {offsets = [0, 4, 0], sizes = [1, 16, 16], strides = [1, 1, 1]} : vector<1x22x16xf32> to vector<1x16x16xf32>
    %179 = vector.broadcast %177 : f32 to vector<1x16x16xf32>
    %180 = arith.mulf %179, %178 : vector<1x16x16xf32>
    %181 = arith.addf %176, %180 : vector<1x16x16xf32>
    %c39 = arith.constant 39 : index
    %182 = memref.load %arg2[%c39] : memref<98xf32, #tpu.memory_space<smem>>
    %183 = vector.extract_strided_slice %156 {offsets = [0, 5, 0], sizes = [1, 16, 16], strides = [1, 1, 1]} : vector<1x22x16xf32> to vector<1x16x16xf32>
    %184 = vector.broadcast %182 : f32 to vector<1x16x16xf32>
    %185 = arith.mulf %184, %183 : vector<1x16x16xf32>
    %186 = arith.addf %181, %185 : vector<1x16x16xf32>
    %c46 = arith.constant 46 : index
    %187 = memref.load %arg2[%c46] : memref<98xf32, #tpu.memory_space<smem>>
    %188 = vector.extract_strided_slice %156 {offsets = [0, 6, 0], sizes = [1, 16, 16], strides = [1, 1, 1]} : vector<1x22x16xf32> to vector<1x16x16xf32>
    %189 = vector.broadcast %187 : f32 to vector<1x16x16xf32>
    %190 = arith.mulf %189, %188 : vector<1x16x16xf32>
    %191 = arith.addf %186, %190 : vector<1x16x16xf32>
    %192 = vector.extract_strided_slice %11 {offsets = [0, 0, 5], sizes = [1, 22, 16], strides = [1, 1, 1]} : vector<1x22x22xf32> to vector<1x22x16xf32>
    %c5 = arith.constant 5 : index
    %193 = memref.load %arg2[%c5] : memref<98xf32, #tpu.memory_space<smem>>
    %194 = vector.extract_strided_slice %192 {offsets = [0, 0, 0], sizes = [1, 16, 16], strides = [1, 1, 1]} : vector<1x22x16xf32> to vector<1x16x16xf32>
    %195 = vector.broadcast %193 : f32 to vector<1x16x16xf32>
    %196 = arith.mulf %195, %194 : vector<1x16x16xf32>
    %197 = arith.addf %191, %196 : vector<1x16x16xf32>
    %c12 = arith.constant 12 : index
    %198 = memref.load %arg2[%c12] : memref<98xf32, #tpu.memory_space<smem>>
    %199 = vector.extract_strided_slice %192 {offsets = [0, 1, 0], sizes = [1, 16, 16], strides = [1, 1, 1]} : vector<1x22x16xf32> to vector<1x16x16xf32>
    %200 = vector.broadcast %198 : f32 to vector<1x16x16xf32>
    %201 = arith.mulf %200, %199 : vector<1x16x16xf32>
    %202 = arith.addf %197, %201 : vector<1x16x16xf32>
    %c19 = arith.constant 19 : index
    %203 = memref.load %arg2[%c19] : memref<98xf32, #tpu.memory_space<smem>>
    %204 = vector.extract_strided_slice %192 {offsets = [0, 2, 0], sizes = [1, 16, 16], strides = [1, 1, 1]} : vector<1x22x16xf32> to vector<1x16x16xf32>
    %205 = vector.broadcast %203 : f32 to vector<1x16x16xf32>
    %206 = arith.mulf %205, %204 : vector<1x16x16xf32>
    %207 = arith.addf %202, %206 : vector<1x16x16xf32>
    %c26 = arith.constant 26 : index
    %208 = memref.load %arg2[%c26] : memref<98xf32, #tpu.memory_space<smem>>
    %209 = vector.extract_strided_slice %192 {offsets = [0, 3, 0], sizes = [1, 16, 16], strides = [1, 1, 1]} : vector<1x22x16xf32> to vector<1x16x16xf32>
    %210 = vector.broadcast %208 : f32 to vector<1x16x16xf32>
    %211 = arith.mulf %210, %209 : vector<1x16x16xf32>
    %212 = arith.addf %207, %211 : vector<1x16x16xf32>
    %c33 = arith.constant 33 : index
    %213 = memref.load %arg2[%c33] : memref<98xf32, #tpu.memory_space<smem>>
    %214 = vector.extract_strided_slice %192 {offsets = [0, 4, 0], sizes = [1, 16, 16], strides = [1, 1, 1]} : vector<1x22x16xf32> to vector<1x16x16xf32>
    %215 = vector.broadcast %213 : f32 to vector<1x16x16xf32>
    %216 = arith.mulf %215, %214 : vector<1x16x16xf32>
    %217 = arith.addf %212, %216 : vector<1x16x16xf32>
    %c40 = arith.constant 40 : index
    %218 = memref.load %arg2[%c40] : memref<98xf32, #tpu.memory_space<smem>>
    %219 = vector.extract_strided_slice %192 {offsets = [0, 5, 0], sizes = [1, 16, 16], strides = [1, 1, 1]} : vector<1x22x16xf32> to vector<1x16x16xf32>
    %220 = vector.broadcast %218 : f32 to vector<1x16x16xf32>
    %221 = arith.mulf %220, %219 : vector<1x16x16xf32>
    %222 = arith.addf %217, %221 : vector<1x16x16xf32>
    %c47 = arith.constant 47 : index
    %223 = memref.load %arg2[%c47] : memref<98xf32, #tpu.memory_space<smem>>
    %224 = vector.extract_strided_slice %192 {offsets = [0, 6, 0], sizes = [1, 16, 16], strides = [1, 1, 1]} : vector<1x22x16xf32> to vector<1x16x16xf32>
    %225 = vector.broadcast %223 : f32 to vector<1x16x16xf32>
    %226 = arith.mulf %225, %224 : vector<1x16x16xf32>
    %227 = arith.addf %222, %226 : vector<1x16x16xf32>
    %228 = vector.extract_strided_slice %11 {offsets = [0, 0, 6], sizes = [1, 22, 16], strides = [1, 1, 1]} : vector<1x22x22xf32> to vector<1x22x16xf32>
    %c6 = arith.constant 6 : index
    %229 = memref.load %arg2[%c6] : memref<98xf32, #tpu.memory_space<smem>>
    %230 = vector.extract_strided_slice %228 {offsets = [0, 0, 0], sizes = [1, 16, 16], strides = [1, 1, 1]} : vector<1x22x16xf32> to vector<1x16x16xf32>
    %231 = vector.broadcast %229 : f32 to vector<1x16x16xf32>
    %232 = arith.mulf %231, %230 : vector<1x16x16xf32>
    %233 = arith.addf %227, %232 : vector<1x16x16xf32>
    %c13 = arith.constant 13 : index
    %234 = memref.load %arg2[%c13] : memref<98xf32, #tpu.memory_space<smem>>
    %235 = vector.extract_strided_slice %228 {offsets = [0, 1, 0], sizes = [1, 16, 16], strides = [1, 1, 1]} : vector<1x22x16xf32> to vector<1x16x16xf32>
    %236 = vector.broadcast %234 : f32 to vector<1x16x16xf32>
    %237 = arith.mulf %236, %235 : vector<1x16x16xf32>
    %238 = arith.addf %233, %237 : vector<1x16x16xf32>
    %c20 = arith.constant 20 : index
    %239 = memref.load %arg2[%c20] : memref<98xf32, #tpu.memory_space<smem>>
    %240 = vector.extract_strided_slice %228 {offsets = [0, 2, 0], sizes = [1, 16, 16], strides = [1, 1, 1]} : vector<1x22x16xf32> to vector<1x16x16xf32>
    %241 = vector.broadcast %239 : f32 to vector<1x16x16xf32>
    %242 = arith.mulf %241, %240 : vector<1x16x16xf32>
    %243 = arith.addf %238, %242 : vector<1x16x16xf32>
    %c27 = arith.constant 27 : index
    %244 = memref.load %arg2[%c27] : memref<98xf32, #tpu.memory_space<smem>>
    %245 = vector.extract_strided_slice %228 {offsets = [0, 3, 0], sizes = [1, 16, 16], strides = [1, 1, 1]} : vector<1x22x16xf32> to vector<1x16x16xf32>
    %246 = vector.broadcast %244 : f32 to vector<1x16x16xf32>
    %247 = arith.mulf %246, %245 : vector<1x16x16xf32>
    %248 = arith.addf %243, %247 : vector<1x16x16xf32>
    %c34 = arith.constant 34 : index
    %249 = memref.load %arg2[%c34] : memref<98xf32, #tpu.memory_space<smem>>
    %250 = vector.extract_strided_slice %228 {offsets = [0, 4, 0], sizes = [1, 16, 16], strides = [1, 1, 1]} : vector<1x22x16xf32> to vector<1x16x16xf32>
    %251 = vector.broadcast %249 : f32 to vector<1x16x16xf32>
    %252 = arith.mulf %251, %250 : vector<1x16x16xf32>
    %253 = arith.addf %248, %252 : vector<1x16x16xf32>
    %c41 = arith.constant 41 : index
    %254 = memref.load %arg2[%c41] : memref<98xf32, #tpu.memory_space<smem>>
    %255 = vector.extract_strided_slice %228 {offsets = [0, 5, 0], sizes = [1, 16, 16], strides = [1, 1, 1]} : vector<1x22x16xf32> to vector<1x16x16xf32>
    %256 = vector.broadcast %254 : f32 to vector<1x16x16xf32>
    %257 = arith.mulf %256, %255 : vector<1x16x16xf32>
    %258 = arith.addf %253, %257 : vector<1x16x16xf32>
    %c48 = arith.constant 48 : index
    %259 = memref.load %arg2[%c48] : memref<98xf32, #tpu.memory_space<smem>>
    %260 = vector.extract_strided_slice %228 {offsets = [0, 6, 0], sizes = [1, 16, 16], strides = [1, 1, 1]} : vector<1x22x16xf32> to vector<1x16x16xf32>
    %261 = vector.broadcast %259 : f32 to vector<1x16x16xf32>
    %262 = arith.mulf %261, %260 : vector<1x16x16xf32>
    %263 = arith.addf %258, %262 : vector<1x16x16xf32>
    %264 = tpu.concatenate %7, %4, %7 in 2 : vector<1x16x3xf32>, vector<1x16x16xf32>, vector<1x16x3xf32> -> vector<1x16x22xf32>
    %265 = tpu.concatenate %8, %264, %8 in 1 : vector<1x3x22xf32>, vector<1x16x22xf32>, vector<1x3x22xf32> -> vector<1x22x22xf32>
    %266 = vector.extract_strided_slice %265 {offsets = [0, 0, 0], sizes = [1, 22, 16], strides = [1, 1, 1]} : vector<1x22x22xf32> to vector<1x22x16xf32>
    %c49 = arith.constant 49 : index
    %267 = memref.load %arg2[%c49] : memref<98xf32, #tpu.memory_space<smem>>
    %268 = vector.extract_strided_slice %266 {offsets = [0, 0, 0], sizes = [1, 16, 16], strides = [1, 1, 1]} : vector<1x22x16xf32> to vector<1x16x16xf32>
    %269 = vector.broadcast %267 : f32 to vector<1x16x16xf32>
    %270 = arith.mulf %269, %268 : vector<1x16x16xf32>
    %271 = arith.addf %263, %270 : vector<1x16x16xf32>
    %c56 = arith.constant 56 : index
    %272 = memref.load %arg2[%c56] : memref<98xf32, #tpu.memory_space<smem>>
    %273 = vector.extract_strided_slice %266 {offsets = [0, 1, 0], sizes = [1, 16, 16], strides = [1, 1, 1]} : vector<1x22x16xf32> to vector<1x16x16xf32>
    %274 = vector.broadcast %272 : f32 to vector<1x16x16xf32>
    %275 = arith.mulf %274, %273 : vector<1x16x16xf32>
    %276 = arith.addf %271, %275 : vector<1x16x16xf32>
    %c63 = arith.constant 63 : index
    %277 = memref.load %arg2[%c63] : memref<98xf32, #tpu.memory_space<smem>>
    %278 = vector.extract_strided_slice %266 {offsets = [0, 2, 0], sizes = [1, 16, 16], strides = [1, 1, 1]} : vector<1x22x16xf32> to vector<1x16x16xf32>
    %279 = vector.broadcast %277 : f32 to vector<1x16x16xf32>
    %280 = arith.mulf %279, %278 : vector<1x16x16xf32>
    %281 = arith.addf %276, %280 : vector<1x16x16xf32>
    %c70 = arith.constant 70 : index
    %282 = memref.load %arg2[%c70] : memref<98xf32, #tpu.memory_space<smem>>
    %283 = vector.extract_strided_slice %266 {offsets = [0, 3, 0], sizes = [1, 16, 16], strides = [1, 1, 1]} : vector<1x22x16xf32> to vector<1x16x16xf32>
    %284 = vector.broadcast %282 : f32 to vector<1x16x16xf32>
    %285 = arith.mulf %284, %283 : vector<1x16x16xf32>
    %286 = arith.addf %281, %285 : vector<1x16x16xf32>
    %c77 = arith.constant 77 : index
    %287 = memref.load %arg2[%c77] : memref<98xf32, #tpu.memory_space<smem>>
    %288 = vector.extract_strided_slice %266 {offsets = [0, 4, 0], sizes = [1, 16, 16], strides = [1, 1, 1]} : vector<1x22x16xf32> to vector<1x16x16xf32>
    %289 = vector.broadcast %287 : f32 to vector<1x16x16xf32>
    %290 = arith.mulf %289, %288 : vector<1x16x16xf32>
    %291 = arith.addf %286, %290 : vector<1x16x16xf32>
    %c84 = arith.constant 84 : index
    %292 = memref.load %arg2[%c84] : memref<98xf32, #tpu.memory_space<smem>>
    %293 = vector.extract_strided_slice %266 {offsets = [0, 5, 0], sizes = [1, 16, 16], strides = [1, 1, 1]} : vector<1x22x16xf32> to vector<1x16x16xf32>
    %294 = vector.broadcast %292 : f32 to vector<1x16x16xf32>
    %295 = arith.mulf %294, %293 : vector<1x16x16xf32>
    %296 = arith.addf %291, %295 : vector<1x16x16xf32>
    %c91 = arith.constant 91 : index
    %297 = memref.load %arg2[%c91] : memref<98xf32, #tpu.memory_space<smem>>
    %298 = vector.extract_strided_slice %266 {offsets = [0, 6, 0], sizes = [1, 16, 16], strides = [1, 1, 1]} : vector<1x22x16xf32> to vector<1x16x16xf32>
    %299 = vector.broadcast %297 : f32 to vector<1x16x16xf32>
    %300 = arith.mulf %299, %298 : vector<1x16x16xf32>
    %301 = arith.addf %296, %300 : vector<1x16x16xf32>
    %302 = vector.extract_strided_slice %265 {offsets = [0, 0, 1], sizes = [1, 22, 16], strides = [1, 1, 1]} : vector<1x22x22xf32> to vector<1x22x16xf32>
    %c50 = arith.constant 50 : index
    %303 = memref.load %arg2[%c50] : memref<98xf32, #tpu.memory_space<smem>>
    %304 = vector.extract_strided_slice %302 {offsets = [0, 0, 0], sizes = [1, 16, 16], strides = [1, 1, 1]} : vector<1x22x16xf32> to vector<1x16x16xf32>
    %305 = vector.broadcast %303 : f32 to vector<1x16x16xf32>
    %306 = arith.mulf %305, %304 : vector<1x16x16xf32>
    %307 = arith.addf %301, %306 : vector<1x16x16xf32>
    %c57 = arith.constant 57 : index
    %308 = memref.load %arg2[%c57] : memref<98xf32, #tpu.memory_space<smem>>
    %309 = vector.extract_strided_slice %302 {offsets = [0, 1, 0], sizes = [1, 16, 16], strides = [1, 1, 1]} : vector<1x22x16xf32> to vector<1x16x16xf32>
    %310 = vector.broadcast %308 : f32 to vector<1x16x16xf32>
    %311 = arith.mulf %310, %309 : vector<1x16x16xf32>
    %312 = arith.addf %307, %311 : vector<1x16x16xf32>
    %c64 = arith.constant 64 : index
    %313 = memref.load %arg2[%c64] : memref<98xf32, #tpu.memory_space<smem>>
    %314 = vector.extract_strided_slice %302 {offsets = [0, 2, 0], sizes = [1, 16, 16], strides = [1, 1, 1]} : vector<1x22x16xf32> to vector<1x16x16xf32>
    %315 = vector.broadcast %313 : f32 to vector<1x16x16xf32>
    %316 = arith.mulf %315, %314 : vector<1x16x16xf32>
    %317 = arith.addf %312, %316 : vector<1x16x16xf32>
    %c71 = arith.constant 71 : index
    %318 = memref.load %arg2[%c71] : memref<98xf32, #tpu.memory_space<smem>>
    %319 = vector.extract_strided_slice %302 {offsets = [0, 3, 0], sizes = [1, 16, 16], strides = [1, 1, 1]} : vector<1x22x16xf32> to vector<1x16x16xf32>
    %320 = vector.broadcast %318 : f32 to vector<1x16x16xf32>
    %321 = arith.mulf %320, %319 : vector<1x16x16xf32>
    %322 = arith.addf %317, %321 : vector<1x16x16xf32>
    %c78 = arith.constant 78 : index
    %323 = memref.load %arg2[%c78] : memref<98xf32, #tpu.memory_space<smem>>
    %324 = vector.extract_strided_slice %302 {offsets = [0, 4, 0], sizes = [1, 16, 16], strides = [1, 1, 1]} : vector<1x22x16xf32> to vector<1x16x16xf32>
    %325 = vector.broadcast %323 : f32 to vector<1x16x16xf32>
    %326 = arith.mulf %325, %324 : vector<1x16x16xf32>
    %327 = arith.addf %322, %326 : vector<1x16x16xf32>
    %c85 = arith.constant 85 : index
    %328 = memref.load %arg2[%c85] : memref<98xf32, #tpu.memory_space<smem>>
    %329 = vector.extract_strided_slice %302 {offsets = [0, 5, 0], sizes = [1, 16, 16], strides = [1, 1, 1]} : vector<1x22x16xf32> to vector<1x16x16xf32>
    %330 = vector.broadcast %328 : f32 to vector<1x16x16xf32>
    %331 = arith.mulf %330, %329 : vector<1x16x16xf32>
    %332 = arith.addf %327, %331 : vector<1x16x16xf32>
    %c92 = arith.constant 92 : index
    %333 = memref.load %arg2[%c92] : memref<98xf32, #tpu.memory_space<smem>>
    %334 = vector.extract_strided_slice %302 {offsets = [0, 6, 0], sizes = [1, 16, 16], strides = [1, 1, 1]} : vector<1x22x16xf32> to vector<1x16x16xf32>
    %335 = vector.broadcast %333 : f32 to vector<1x16x16xf32>
    %336 = arith.mulf %335, %334 : vector<1x16x16xf32>
    %337 = arith.addf %332, %336 : vector<1x16x16xf32>
    %338 = vector.extract_strided_slice %265 {offsets = [0, 0, 2], sizes = [1, 22, 16], strides = [1, 1, 1]} : vector<1x22x22xf32> to vector<1x22x16xf32>
    %c51 = arith.constant 51 : index
    %339 = memref.load %arg2[%c51] : memref<98xf32, #tpu.memory_space<smem>>
    %340 = vector.extract_strided_slice %338 {offsets = [0, 0, 0], sizes = [1, 16, 16], strides = [1, 1, 1]} : vector<1x22x16xf32> to vector<1x16x16xf32>
    %341 = vector.broadcast %339 : f32 to vector<1x16x16xf32>
    %342 = arith.mulf %341, %340 : vector<1x16x16xf32>
    %343 = arith.addf %337, %342 : vector<1x16x16xf32>
    %c58 = arith.constant 58 : index
    %344 = memref.load %arg2[%c58] : memref<98xf32, #tpu.memory_space<smem>>
    %345 = vector.extract_strided_slice %338 {offsets = [0, 1, 0], sizes = [1, 16, 16], strides = [1, 1, 1]} : vector<1x22x16xf32> to vector<1x16x16xf32>
    %346 = vector.broadcast %344 : f32 to vector<1x16x16xf32>
    %347 = arith.mulf %346, %345 : vector<1x16x16xf32>
    %348 = arith.addf %343, %347 : vector<1x16x16xf32>
    %c65 = arith.constant 65 : index
    %349 = memref.load %arg2[%c65] : memref<98xf32, #tpu.memory_space<smem>>
    %350 = vector.extract_strided_slice %338 {offsets = [0, 2, 0], sizes = [1, 16, 16], strides = [1, 1, 1]} : vector<1x22x16xf32> to vector<1x16x16xf32>
    %351 = vector.broadcast %349 : f32 to vector<1x16x16xf32>
    %352 = arith.mulf %351, %350 : vector<1x16x16xf32>
    %353 = arith.addf %348, %352 : vector<1x16x16xf32>
    %c72 = arith.constant 72 : index
    %354 = memref.load %arg2[%c72] : memref<98xf32, #tpu.memory_space<smem>>
    %355 = vector.extract_strided_slice %338 {offsets = [0, 3, 0], sizes = [1, 16, 16], strides = [1, 1, 1]} : vector<1x22x16xf32> to vector<1x16x16xf32>
    %356 = vector.broadcast %354 : f32 to vector<1x16x16xf32>
    %357 = arith.mulf %356, %355 : vector<1x16x16xf32>
    %358 = arith.addf %353, %357 : vector<1x16x16xf32>
    %c79 = arith.constant 79 : index
    %359 = memref.load %arg2[%c79] : memref<98xf32, #tpu.memory_space<smem>>
    %360 = vector.extract_strided_slice %338 {offsets = [0, 4, 0], sizes = [1, 16, 16], strides = [1, 1, 1]} : vector<1x22x16xf32> to vector<1x16x16xf32>
    %361 = vector.broadcast %359 : f32 to vector<1x16x16xf32>
    %362 = arith.mulf %361, %360 : vector<1x16x16xf32>
    %363 = arith.addf %358, %362 : vector<1x16x16xf32>
    %c86 = arith.constant 86 : index
    %364 = memref.load %arg2[%c86] : memref<98xf32, #tpu.memory_space<smem>>
    %365 = vector.extract_strided_slice %338 {offsets = [0, 5, 0], sizes = [1, 16, 16], strides = [1, 1, 1]} : vector<1x22x16xf32> to vector<1x16x16xf32>
    %366 = vector.broadcast %364 : f32 to vector<1x16x16xf32>
    %367 = arith.mulf %366, %365 : vector<1x16x16xf32>
    %368 = arith.addf %363, %367 : vector<1x16x16xf32>
    %c93 = arith.constant 93 : index
    %369 = memref.load %arg2[%c93] : memref<98xf32, #tpu.memory_space<smem>>
    %370 = vector.extract_strided_slice %338 {offsets = [0, 6, 0], sizes = [1, 16, 16], strides = [1, 1, 1]} : vector<1x22x16xf32> to vector<1x16x16xf32>
    %371 = vector.broadcast %369 : f32 to vector<1x16x16xf32>
    %372 = arith.mulf %371, %370 : vector<1x16x16xf32>
    %373 = arith.addf %368, %372 : vector<1x16x16xf32>
    %374 = vector.extract_strided_slice %265 {offsets = [0, 0, 3], sizes = [1, 22, 16], strides = [1, 1, 1]} : vector<1x22x22xf32> to vector<1x22x16xf32>
    %c52 = arith.constant 52 : index
    %375 = memref.load %arg2[%c52] : memref<98xf32, #tpu.memory_space<smem>>
    %376 = vector.extract_strided_slice %374 {offsets = [0, 0, 0], sizes = [1, 16, 16], strides = [1, 1, 1]} : vector<1x22x16xf32> to vector<1x16x16xf32>
    %377 = vector.broadcast %375 : f32 to vector<1x16x16xf32>
    %378 = arith.mulf %377, %376 : vector<1x16x16xf32>
    %379 = arith.addf %373, %378 : vector<1x16x16xf32>
    %c59 = arith.constant 59 : index
    %380 = memref.load %arg2[%c59] : memref<98xf32, #tpu.memory_space<smem>>
    %381 = vector.extract_strided_slice %374 {offsets = [0, 1, 0], sizes = [1, 16, 16], strides = [1, 1, 1]} : vector<1x22x16xf32> to vector<1x16x16xf32>
    %382 = vector.broadcast %380 : f32 to vector<1x16x16xf32>
    %383 = arith.mulf %382, %381 : vector<1x16x16xf32>
    %384 = arith.addf %379, %383 : vector<1x16x16xf32>
    %c66 = arith.constant 66 : index
    %385 = memref.load %arg2[%c66] : memref<98xf32, #tpu.memory_space<smem>>
    %386 = vector.extract_strided_slice %374 {offsets = [0, 2, 0], sizes = [1, 16, 16], strides = [1, 1, 1]} : vector<1x22x16xf32> to vector<1x16x16xf32>
    %387 = vector.broadcast %385 : f32 to vector<1x16x16xf32>
    %388 = arith.mulf %387, %386 : vector<1x16x16xf32>
    %389 = arith.addf %384, %388 : vector<1x16x16xf32>
    %c73 = arith.constant 73 : index
    %390 = memref.load %arg2[%c73] : memref<98xf32, #tpu.memory_space<smem>>
    %391 = vector.extract_strided_slice %374 {offsets = [0, 3, 0], sizes = [1, 16, 16], strides = [1, 1, 1]} : vector<1x22x16xf32> to vector<1x16x16xf32>
    %392 = vector.broadcast %390 : f32 to vector<1x16x16xf32>
    %393 = arith.mulf %392, %391 : vector<1x16x16xf32>
    %394 = arith.addf %389, %393 : vector<1x16x16xf32>
    %c80 = arith.constant 80 : index
    %395 = memref.load %arg2[%c80] : memref<98xf32, #tpu.memory_space<smem>>
    %396 = vector.extract_strided_slice %374 {offsets = [0, 4, 0], sizes = [1, 16, 16], strides = [1, 1, 1]} : vector<1x22x16xf32> to vector<1x16x16xf32>
    %397 = vector.broadcast %395 : f32 to vector<1x16x16xf32>
    %398 = arith.mulf %397, %396 : vector<1x16x16xf32>
    %399 = arith.addf %394, %398 : vector<1x16x16xf32>
    %c87 = arith.constant 87 : index
    %400 = memref.load %arg2[%c87] : memref<98xf32, #tpu.memory_space<smem>>
    %401 = vector.extract_strided_slice %374 {offsets = [0, 5, 0], sizes = [1, 16, 16], strides = [1, 1, 1]} : vector<1x22x16xf32> to vector<1x16x16xf32>
    %402 = vector.broadcast %400 : f32 to vector<1x16x16xf32>
    %403 = arith.mulf %402, %401 : vector<1x16x16xf32>
    %404 = arith.addf %399, %403 : vector<1x16x16xf32>
    %c94 = arith.constant 94 : index
    %405 = memref.load %arg2[%c94] : memref<98xf32, #tpu.memory_space<smem>>
    %406 = vector.extract_strided_slice %374 {offsets = [0, 6, 0], sizes = [1, 16, 16], strides = [1, 1, 1]} : vector<1x22x16xf32> to vector<1x16x16xf32>
    %407 = vector.broadcast %405 : f32 to vector<1x16x16xf32>
    %408 = arith.mulf %407, %406 : vector<1x16x16xf32>
    %409 = arith.addf %404, %408 : vector<1x16x16xf32>
    %410 = vector.extract_strided_slice %265 {offsets = [0, 0, 4], sizes = [1, 22, 16], strides = [1, 1, 1]} : vector<1x22x22xf32> to vector<1x22x16xf32>
    %c53 = arith.constant 53 : index
    %411 = memref.load %arg2[%c53] : memref<98xf32, #tpu.memory_space<smem>>
    %412 = vector.extract_strided_slice %410 {offsets = [0, 0, 0], sizes = [1, 16, 16], strides = [1, 1, 1]} : vector<1x22x16xf32> to vector<1x16x16xf32>
    %413 = vector.broadcast %411 : f32 to vector<1x16x16xf32>
    %414 = arith.mulf %413, %412 : vector<1x16x16xf32>
    %415 = arith.addf %409, %414 : vector<1x16x16xf32>
    %c60 = arith.constant 60 : index
    %416 = memref.load %arg2[%c60] : memref<98xf32, #tpu.memory_space<smem>>
    %417 = vector.extract_strided_slice %410 {offsets = [0, 1, 0], sizes = [1, 16, 16], strides = [1, 1, 1]} : vector<1x22x16xf32> to vector<1x16x16xf32>
    %418 = vector.broadcast %416 : f32 to vector<1x16x16xf32>
    %419 = arith.mulf %418, %417 : vector<1x16x16xf32>
    %420 = arith.addf %415, %419 : vector<1x16x16xf32>
    %c67 = arith.constant 67 : index
    %421 = memref.load %arg2[%c67] : memref<98xf32, #tpu.memory_space<smem>>
    %422 = vector.extract_strided_slice %410 {offsets = [0, 2, 0], sizes = [1, 16, 16], strides = [1, 1, 1]} : vector<1x22x16xf32> to vector<1x16x16xf32>
    %423 = vector.broadcast %421 : f32 to vector<1x16x16xf32>
    %424 = arith.mulf %423, %422 : vector<1x16x16xf32>
    %425 = arith.addf %420, %424 : vector<1x16x16xf32>
    %c74 = arith.constant 74 : index
    %426 = memref.load %arg2[%c74] : memref<98xf32, #tpu.memory_space<smem>>
    %427 = vector.extract_strided_slice %410 {offsets = [0, 3, 0], sizes = [1, 16, 16], strides = [1, 1, 1]} : vector<1x22x16xf32> to vector<1x16x16xf32>
    %428 = vector.broadcast %426 : f32 to vector<1x16x16xf32>
    %429 = arith.mulf %428, %427 : vector<1x16x16xf32>
    %430 = arith.addf %425, %429 : vector<1x16x16xf32>
    %c81 = arith.constant 81 : index
    %431 = memref.load %arg2[%c81] : memref<98xf32, #tpu.memory_space<smem>>
    %432 = vector.extract_strided_slice %410 {offsets = [0, 4, 0], sizes = [1, 16, 16], strides = [1, 1, 1]} : vector<1x22x16xf32> to vector<1x16x16xf32>
    %433 = vector.broadcast %431 : f32 to vector<1x16x16xf32>
    %434 = arith.mulf %433, %432 : vector<1x16x16xf32>
    %435 = arith.addf %430, %434 : vector<1x16x16xf32>
    %c88 = arith.constant 88 : index
    %436 = memref.load %arg2[%c88] : memref<98xf32, #tpu.memory_space<smem>>
    %437 = vector.extract_strided_slice %410 {offsets = [0, 5, 0], sizes = [1, 16, 16], strides = [1, 1, 1]} : vector<1x22x16xf32> to vector<1x16x16xf32>
    %438 = vector.broadcast %436 : f32 to vector<1x16x16xf32>
    %439 = arith.mulf %438, %437 : vector<1x16x16xf32>
    %440 = arith.addf %435, %439 : vector<1x16x16xf32>
    %c95 = arith.constant 95 : index
    %441 = memref.load %arg2[%c95] : memref<98xf32, #tpu.memory_space<smem>>
    %442 = vector.extract_strided_slice %410 {offsets = [0, 6, 0], sizes = [1, 16, 16], strides = [1, 1, 1]} : vector<1x22x16xf32> to vector<1x16x16xf32>
    %443 = vector.broadcast %441 : f32 to vector<1x16x16xf32>
    %444 = arith.mulf %443, %442 : vector<1x16x16xf32>
    %445 = arith.addf %440, %444 : vector<1x16x16xf32>
    %446 = vector.extract_strided_slice %265 {offsets = [0, 0, 5], sizes = [1, 22, 16], strides = [1, 1, 1]} : vector<1x22x22xf32> to vector<1x22x16xf32>
    %c54 = arith.constant 54 : index
    %447 = memref.load %arg2[%c54] : memref<98xf32, #tpu.memory_space<smem>>
    %448 = vector.extract_strided_slice %446 {offsets = [0, 0, 0], sizes = [1, 16, 16], strides = [1, 1, 1]} : vector<1x22x16xf32> to vector<1x16x16xf32>
    %449 = vector.broadcast %447 : f32 to vector<1x16x16xf32>
    %450 = arith.mulf %449, %448 : vector<1x16x16xf32>
    %451 = arith.addf %445, %450 : vector<1x16x16xf32>
    %c61 = arith.constant 61 : index
    %452 = memref.load %arg2[%c61] : memref<98xf32, #tpu.memory_space<smem>>
    %453 = vector.extract_strided_slice %446 {offsets = [0, 1, 0], sizes = [1, 16, 16], strides = [1, 1, 1]} : vector<1x22x16xf32> to vector<1x16x16xf32>
    %454 = vector.broadcast %452 : f32 to vector<1x16x16xf32>
    %455 = arith.mulf %454, %453 : vector<1x16x16xf32>
    %456 = arith.addf %451, %455 : vector<1x16x16xf32>
    %c68 = arith.constant 68 : index
    %457 = memref.load %arg2[%c68] : memref<98xf32, #tpu.memory_space<smem>>
    %458 = vector.extract_strided_slice %446 {offsets = [0, 2, 0], sizes = [1, 16, 16], strides = [1, 1, 1]} : vector<1x22x16xf32> to vector<1x16x16xf32>
    %459 = vector.broadcast %457 : f32 to vector<1x16x16xf32>
    %460 = arith.mulf %459, %458 : vector<1x16x16xf32>
    %461 = arith.addf %456, %460 : vector<1x16x16xf32>
    %c75 = arith.constant 75 : index
    %462 = memref.load %arg2[%c75] : memref<98xf32, #tpu.memory_space<smem>>
    %463 = vector.extract_strided_slice %446 {offsets = [0, 3, 0], sizes = [1, 16, 16], strides = [1, 1, 1]} : vector<1x22x16xf32> to vector<1x16x16xf32>
    %464 = vector.broadcast %462 : f32 to vector<1x16x16xf32>
    %465 = arith.mulf %464, %463 : vector<1x16x16xf32>
    %466 = arith.addf %461, %465 : vector<1x16x16xf32>
    %c82 = arith.constant 82 : index
    %467 = memref.load %arg2[%c82] : memref<98xf32, #tpu.memory_space<smem>>
    %468 = vector.extract_strided_slice %446 {offsets = [0, 4, 0], sizes = [1, 16, 16], strides = [1, 1, 1]} : vector<1x22x16xf32> to vector<1x16x16xf32>
    %469 = vector.broadcast %467 : f32 to vector<1x16x16xf32>
    %470 = arith.mulf %469, %468 : vector<1x16x16xf32>
    %471 = arith.addf %466, %470 : vector<1x16x16xf32>
    %c89 = arith.constant 89 : index
    %472 = memref.load %arg2[%c89] : memref<98xf32, #tpu.memory_space<smem>>
    %473 = vector.extract_strided_slice %446 {offsets = [0, 5, 0], sizes = [1, 16, 16], strides = [1, 1, 1]} : vector<1x22x16xf32> to vector<1x16x16xf32>
    %474 = vector.broadcast %472 : f32 to vector<1x16x16xf32>
    %475 = arith.mulf %474, %473 : vector<1x16x16xf32>
    %476 = arith.addf %471, %475 : vector<1x16x16xf32>
    %c96 = arith.constant 96 : index
    %477 = memref.load %arg2[%c96] : memref<98xf32, #tpu.memory_space<smem>>
    %478 = vector.extract_strided_slice %446 {offsets = [0, 6, 0], sizes = [1, 16, 16], strides = [1, 1, 1]} : vector<1x22x16xf32> to vector<1x16x16xf32>
    %479 = vector.broadcast %477 : f32 to vector<1x16x16xf32>
    %480 = arith.mulf %479, %478 : vector<1x16x16xf32>
    %481 = arith.addf %476, %480 : vector<1x16x16xf32>
    %482 = vector.extract_strided_slice %265 {offsets = [0, 0, 6], sizes = [1, 22, 16], strides = [1, 1, 1]} : vector<1x22x22xf32> to vector<1x22x16xf32>
    %c55 = arith.constant 55 : index
    %483 = memref.load %arg2[%c55] : memref<98xf32, #tpu.memory_space<smem>>
    %484 = vector.extract_strided_slice %482 {offsets = [0, 0, 0], sizes = [1, 16, 16], strides = [1, 1, 1]} : vector<1x22x16xf32> to vector<1x16x16xf32>
    %485 = vector.broadcast %483 : f32 to vector<1x16x16xf32>
    %486 = arith.mulf %485, %484 : vector<1x16x16xf32>
    %487 = arith.addf %481, %486 : vector<1x16x16xf32>
    %c62 = arith.constant 62 : index
    %488 = memref.load %arg2[%c62] : memref<98xf32, #tpu.memory_space<smem>>
    %489 = vector.extract_strided_slice %482 {offsets = [0, 1, 0], sizes = [1, 16, 16], strides = [1, 1, 1]} : vector<1x22x16xf32> to vector<1x16x16xf32>
    %490 = vector.broadcast %488 : f32 to vector<1x16x16xf32>
    %491 = arith.mulf %490, %489 : vector<1x16x16xf32>
    %492 = arith.addf %487, %491 : vector<1x16x16xf32>
    %c69 = arith.constant 69 : index
    %493 = memref.load %arg2[%c69] : memref<98xf32, #tpu.memory_space<smem>>
    %494 = vector.extract_strided_slice %482 {offsets = [0, 2, 0], sizes = [1, 16, 16], strides = [1, 1, 1]} : vector<1x22x16xf32> to vector<1x16x16xf32>
    %495 = vector.broadcast %493 : f32 to vector<1x16x16xf32>
    %496 = arith.mulf %495, %494 : vector<1x16x16xf32>
    %497 = arith.addf %492, %496 : vector<1x16x16xf32>
    %c76 = arith.constant 76 : index
    %498 = memref.load %arg2[%c76] : memref<98xf32, #tpu.memory_space<smem>>
    %499 = vector.extract_strided_slice %482 {offsets = [0, 3, 0], sizes = [1, 16, 16], strides = [1, 1, 1]} : vector<1x22x16xf32> to vector<1x16x16xf32>
    %500 = vector.broadcast %498 : f32 to vector<1x16x16xf32>
    %501 = arith.mulf %500, %499 : vector<1x16x16xf32>
    %502 = arith.addf %497, %501 : vector<1x16x16xf32>
    %c83 = arith.constant 83 : index
    %503 = memref.load %arg2[%c83] : memref<98xf32, #tpu.memory_space<smem>>
    %504 = vector.extract_strided_slice %482 {offsets = [0, 4, 0], sizes = [1, 16, 16], strides = [1, 1, 1]} : vector<1x22x16xf32> to vector<1x16x16xf32>
    %505 = vector.broadcast %503 : f32 to vector<1x16x16xf32>
    %506 = arith.mulf %505, %504 : vector<1x16x16xf32>
    %507 = arith.addf %502, %506 : vector<1x16x16xf32>
    %c90 = arith.constant 90 : index
    %508 = memref.load %arg2[%c90] : memref<98xf32, #tpu.memory_space<smem>>
    %509 = vector.extract_strided_slice %482 {offsets = [0, 5, 0], sizes = [1, 16, 16], strides = [1, 1, 1]} : vector<1x22x16xf32> to vector<1x16x16xf32>
    %510 = vector.broadcast %508 : f32 to vector<1x16x16xf32>
    %511 = arith.mulf %510, %509 : vector<1x16x16xf32>
    %512 = arith.addf %507, %511 : vector<1x16x16xf32>
    %c97 = arith.constant 97 : index
    %513 = memref.load %arg2[%c97] : memref<98xf32, #tpu.memory_space<smem>>
    %514 = vector.extract_strided_slice %482 {offsets = [0, 6, 0], sizes = [1, 16, 16], strides = [1, 1, 1]} : vector<1x22x16xf32> to vector<1x16x16xf32>
    %515 = vector.broadcast %513 : f32 to vector<1x16x16xf32>
    %516 = arith.mulf %515, %514 : vector<1x16x16xf32>
    %517 = arith.addf %512, %516 : vector<1x16x16xf32>
    %518 = vector.broadcast %5 : f32 to vector<1x16x16xf32>
    %519 = arith.mulf %517, %518 : vector<1x16x16xf32>
    %520 = vector.broadcast %6 : f32 to vector<1x16x16xf32>
    %521 = arith.addf %519, %520 : vector<1x16x16xf32>
    %522 = arith.negf %521 : vector<1x16x16xf32>
    %523 = math.exp %522 : vector<1x16x16xf32>
    %cst_11 = arith.constant 1.000000e+00 : f32
    %524 = vector.broadcast %cst_11 : f32 to vector<1x16x16xf32>
    %525 = arith.addf %524, %523 : vector<1x16x16xf32>
    %526 = arith.divf %524, %525 : vector<1x16x16xf32>
    %527 = arith.mulf %521, %526 : vector<1x16x16xf32>
    %c0_12 = arith.constant 0 : index
    %c0_13 = arith.constant 0 : index
    %c0_14 = arith.constant 0 : index
    %c0_15 = arith.constant 0 : index
    %528 = vector.load %arg4[%c0_12, %c0_13, %c0_14, %c0_15] : memref<1x1x16x16xf32, #tpu.memory_space<vmem>>, vector<1x1x16x16xf32>
    %529 = vector.shape_cast %528 : vector<1x1x16x16xf32> to vector<1x16x16xf32>
    %530 = vector.shape_cast %527 : vector<1x16x16xf32> to vector<1x1x16x16xf32>
    tpu.vector_store %arg4[%c0_12, %c0_13, %c0_14, %c0_15], %530 {strides = array<i32>} : memref<1x1x16x16xf32, #tpu.memory_space<vmem>>, vector<1x1x16x16xf32>,
    return
  }
  func.func @transform_0(%arg0: i32) -> (i32, i32, i32, i32) {
    %c0_i32 = arith.constant 0 : i32
    %c0_i32_0 = arith.constant 0 : i32
    %c0_i32_1 = arith.constant 0 : i32
    %c0_i32_2 = arith.constant 0 : i32
    return %arg0, %c0_i32, %c0_i32_0, %c0_i32_1 : i32, i32, i32, i32
  }
  func.func @transform_1(%arg0: i32) -> i32 {
    %c0_i32 = arith.constant 0 : i32
    %c0_i32_0 = arith.constant 0 : i32
    return %c0_i32 : i32
  }
  func.func @transform_2(%arg0: i32) -> i32 {
    %c0_i32 = arith.constant 0 : i32
    %c0_i32_0 = arith.constant 0 : i32
    return %c0_i32 : i32
  }
  func.func @transform_3(%arg0: i32) -> (i32, i32, i32, i32) {
    %c0_i32 = arith.constant 0 : i32
    %c0_i32_0 = arith.constant 0 : i32
    %c0_i32_1 = arith.constant 0 : i32
    %c0_i32_2 = arith.constant 0 : i32
    return %arg0, %c0_i32, %c0_i32_0, %c0_i32_1 : i32, i32, i32, i32
  }
}

</mosaic_0001>

<llo_original>
// kernel: tpu_custom_call.1
$region0: #{tpu_custom_call.1}
  #allocation0 [shape = 'u32[]', space=smem, size = 0x4, offset = 0x4, fixed_abs, tag = 'smem constant byte address 0x4 - core index']
  #allocation1 [shape = 'u32[72,128]{1,0:T(1,128)}', space=vmem, size = 0x9000, scoped, tag = 'internal scratch']
  %s0 = inlined_call_operand.hbm [shape: f32[2,4,16,16], index: 0, kind: input, shape index: {}]
  %s1 = inlined_call_operand.hbm [shape: f32[98], index: 1, kind: input, shape index: {}]
  %s2 = inlined_call_operand.vmem [shape: f32[2], index: 2, kind: input, shape index: {}]
  %s3 = inlined_call_operand.hbm [shape: f32[2,1,16,16], index: 3, kind: output, shape index: {}]
  %s4 = sld [smem:[#allocation0]]
  $region57: #{tpu_custom_call.1} parent=0
    _
  %s6 = ssub.s32 1, %s4
  %s7 = scalar_select 0, %s6, %s4
  $region1: #{tpu_custom_call.1} parent=0
    #allocation2 [shape = 'u8[65536]{0}', space=vmem, size = 0x10000, scoped, tag = 'input window, operand 0']
    #allocation3 [shape = 's32[2]{0}', space=sflag, size = 0x8, scoped, tag = 'scoped memory for tpu_custom_call.1']
    #allocation4 [shape = 's32[2]{0}', space=sflag, size = 0x8, scoped, tag = 'scoped memory for tpu_custom_call.1']
    #allocation5 [shape = 's32[2]{0}', space=sflag, size = 0x8, scoped, tag = 'scoped memory for tpu_custom_call.1']
    #allocation6 [shape = 's32[2]{0}', space=sflag, size = 0x8, scoped, tag = 'scoped memory for tpu_custom_call.1']
    #allocation7 [shape = 'u8[512]{0}', space=smem, size = 0x200, scoped, tag = 'input window, operand 1, single buffered']
    #allocation8 [shape = 'u8[512]{0}', space=smem, size = 0x200, scoped, tag = 'input window, operand 2, single buffered']
    #allocation9 [shape = 'u8[16384]{0}', space=vmem, size = 0x4000, scoped, tag = 'output window, operand 0']
    %8 = vsyncpa [#allocation3], 0
    %s9 = scalar_lea.sflag [#allocation3], 1
    %10 = vsyncpa %s9, 0
    %11 = vsyncpa [#allocation5], 0
    %12 = vsyncpa [#allocation6], 0
    %13 = vsyncpa [#allocation4], 0
    %s14 = scalar_lea.sflag [#allocation4], 1
    %15 = vsyncpa %s14, 0
    loop: start=0, step=1, limit=4
    $region2: #{tpu_custom_call.1} parent=1 // loop_pre_header
      _
    $region3: #{tpu_custom_call.1} parent=1 // loop_header
      %s17 = sphi 0, %s21
      %p18 = scmp.ge.s32.totalorder %s17, 4
      %s27 = sphi 0, %s29
      %s30 = sphi 0, %s27
      %s31 = sphi 0, %s30
      %s47 = sphi 0, %s31
      %s51 = sphi 0, %s51
      %s53 = sphi 0, %s51
      %s54 = sphi 0, %s53
      %s68 = sphi 0, %s54
      %s72 = sphi 0, %s72
      %s74 = sphi 0, %s72
      %s75 = sphi 0, %s74
      %s89 = sphi 0, %s75
      %s95 = sphi 0, %s97
      %s98 = sphi 0, %s95
      %s99 = sphi 0, %s98
      %s115 = sphi 0, %s99
    $region4: #{tpu_custom_call.1} parent=1 // loop_header_branch
      %20 = sbr.rel (%p18) target = $region8
    $region5: #{tpu_custom_call.1} parent=1 // loop_body
      %s22 = ssub.s32 %s17, 1
      %s23 = ssub.s32 %s17, 2
      %s24 = sadd.s32 %s17, 1
      %s25 = ssub.s32 %s17, %s24
      %p26 = scmp.eq.s32.totalorder %s25, 0
      %s28 = sadd.s32 %s27, 1
      %s29 = scalar_select %p26, %s27, %s28
      %p32 = pneg %p26
      %p33 = scmp.eq.s32.totalorder %s17, 1
      %p34 = por %p32, %p33
      %p35 = scmp.ne.s32.totalorder %s27, %s30
      %p36 = scmp.eq.s32.totalorder %s17, 0
      %p37 = por %p35, %p36
      %p38 = scmp.ne.s32.totalorder %s27, %s30
      %p39 = scmp.eq.s32.totalorder %s22, 1
      %p40 = por %p38, %p39
      %p41 = scmp.ne.s32.totalorder %s30, %s31
      %p42 = scmp.eq.s32.totalorder %s22, 0
      %p43 = por %p41, %p42
      %p44 = scmp.ne.s32.totalorder %s30, %s31
      %p45 = scmp.eq.s32.totalorder %s23, 1
      %p46 = por %p44, %p45
      %p48 = scmp.ne.s32.totalorder %s31, %s47
      %p49 = scmp.eq.s32.totalorder %s23, 0
      %p50 = por %p48, %p49
      %s52 = sadd.s32 %s51, 1
      %p55 = scmp.eq.s32.totalorder %s17, 1
      %p56 = scmp.ne.s32.totalorder %s51, %s53
      %p57 = scmp.eq.s32.totalorder %s17, 0
      %p58 = por %p56, %p57
      %p59 = scmp.ne.s32.totalorder %s51, %s53
      %p60 = scmp.eq.s32.totalorder %s22, 1
      %p61 = por %p59, %p60
      %p62 = scmp.ne.s32.totalorder %s53, %s54
      %p63 = scmp.eq.s32.totalorder %s22, 0
      %p64 = por %p62, %p63
      %p65 = scmp.ne.s32.totalorder %s53, %s54
      %p66 = scmp.eq.s32.totalorder %s23, 1
      %p67 = por %p65, %p66
      %p69 = scmp.ne.s32.totalorder %s54, %s68
      %p70 = scmp.eq.s32.totalorder %s23, 0
      %p71 = por %p69, %p70
      %s73 = sadd.s32 %s72, 1
      %p76 = scmp.eq.s32.totalorder %s17, 1
      %p77 = scmp.ne.s32.totalorder %s72, %s74
      %p78 = scmp.eq.s32.totalorder %s17, 0
      %p79 = por %p77, %p78
      %p80 = scmp.ne.s32.totalorder %s72, %s74
      %p81 = scmp.eq.s32.totalorder %s22, 1
      %p82 = por %p80, %p81
      %p83 = scmp.ne.s32.totalorder %s74, %s75
      %p84 = scmp.eq.s32.totalorder %s22, 0
      %p85 = por %p83, %p84
      %p86 = scmp.ne.s32.totalorder %s74, %s75
      %p87 = scmp.eq.s32.totalorder %s23, 1
      %p88 = por %p86, %p87
      %p90 = scmp.ne.s32.totalorder %s75, %s89
      %p91 = scmp.eq.s32.totalorder %s23, 0
      %p92 = por %p90, %p91
      %s93 = ssub.s32 %s17, %s24
      %p94 = scmp.eq.s32.totalorder %s93, 0
      %s96 = sadd.s32 %s95, 1
      %s97 = scalar_select %p94, %s95, %s96
      %p100 = pneg %p94
      %p101 = scmp.eq.s32.totalorder %s17, 1
      %p102 = por %p100, %p101
      %p103 = scmp.ne.s32.totalorder %s95, %s98
      %p104 = scmp.eq.s32.totalorder %s17, 0
      %p105 = por %p103, %p104
      %p106 = scmp.ne.s32.totalorder %s95, %s98
      %p107 = scmp.eq.s32.totalorder %s22, 1
      %p108 = por %p106, %p107
      %p109 = scmp.ne.s32.totalorder %s98, %s99
      %p110 = scmp.eq.s32.totalorder %s22, 0
      %p111 = por %p109, %p110
      %p112 = scmp.ne.s32.totalorder %s98, %s99
      %p113 = scmp.eq.s32.totalorder %s23, 1
      %p114 = por %p112, %p113
      %p116 = scmp.ne.s32.totalorder %s99, %s115
      %p117 = scmp.eq.s32.totalorder %s23, 0
      %p118 = por %p116, %p117
      %p119 = scmp.le.s32.totalorder 1, %s17
      %p120 = scmp.lt.s32.totalorder %s17, 3
      %p121 = pnand %p119, %p120
      %p122 = pneg %p121
      // Predicated region
      $region9: #{tpu_custom_call.1} parent=5 // pred_check
        _
      $region10: #{tpu_custom_call.1} parent=5 // pred_check_branch
        %124 = sbr.rel (%p121) target = $region12
      $region11: #{tpu_custom_call.1} parent=5 // pred_region
        %s125 = ssub.s32 %s17, 1
        // Predicated region
        $region13: #{tpu_custom_call.1} parent=11 // pred_check
          %p126 = pneg %p64
        $region14: #{tpu_custom_call.1} parent=11 // pred_check_branch
          %128 = sbr.rel (%p126) target = $region16
        $region15: #{tpu_custom_call.1} parent=11 // pred_region
          %130 = vsyncadd [#allocation5], 0
          %s132 = sshll.u32 %s1, 4
          %s133 = int_to_ptr.hbm [resolvable:$true] %s132
          %135 = dma.hbm_to_smem %s133, 16, [#allocation7], [#allocation5]
        $region16: #{tpu_custom_call.1} parent=11 // pred_fallthru
          _
        // Predicated region
        $region17: #{tpu_custom_call.1} parent=11 // pred_check
          %p136 = pneg %p85
        $region18: #{tpu_custom_call.1} parent=11 // pred_check_branch
          %138 = sbr.rel (%p136) target = $region20
        $region19: #{tpu_custom_call.1} parent=11 // pred_region
          %140 = vsyncadd [#allocation6], 0
          %s142 = sshll.u32 %s2, 4
          %s143 = int_to_ptr.vmem [resolvable:$true] %s142
          %145 = dma.vmem_to_smem %s143, 16, [#allocation8], [#allocation6]
        $region20: #{tpu_custom_call.1} parent=11 // pred_fallthru
          _
      $region12: #{tpu_custom_call.1} parent=5 // pred_fallthru
        _
      %p146 = scmp.lt.s32.totalorder %s17, 2
      // Predicated region
      $region21: #{tpu_custom_call.1} parent=5 // pred_check
        %p147 = pneg %p146
      $region22: #{tpu_custom_call.1} parent=5 // pred_check_branch
        %149 = sbr.rel (%p147) target = $region24
      $region23: #{tpu_custom_call.1} parent=5 // pred_region
        // Predicated region
        $region25: #{tpu_custom_call.1} parent=23 // pred_check
          %p150 = pneg %p37
        $region26: #{tpu_custom_call.1} parent=23 // pred_check_branch
          %152 = sbr.rel (%p150) target = $region28
        $region27: #{tpu_custom_call.1} parent=23 // pred_region
          %s153 = sand.u32 %s27, 1
          %s154 = scalar_lea.sflag [#allocation3], %s153
          %s155 = sand.u32 %s27, 1
          %s156 = smul.addr %s155, 64
          %s157 = scalar_lea.vmem [#allocation2], %s156
          %159 = vsyncadd %s154, 0
          %s160 = smul.addr %s17, 8
          %s161 = smul.addr %s160, 8
          %s162 = scalar_lea.hbm %s0, %s161
          %s163 = sshll.u32 %s162, 4
          %s164 = int_to_ptr.hbm [resolvable:$true] %s163
          %s165 = sshll.u32 %s157, 4
          %s166 = int_to_ptr.vmem [resolvable:$true] %s165
          %171 = dma.hbm_to_vmem [thread:$0]  %s164, 1024, %s166, %s154, 128, 128, 8
        $region28: #{tpu_custom_call.1} parent=23 // pred_fallthru
          _
      $region24: #{tpu_custom_call.1} parent=5 // pred_fallthru
        _
      %p172 = scmp.le.s32.totalorder 1, %s17
      %p173 = scmp.lt.s32.totalorder %s17, 3
      %p174 = pnand %p172, %p173
      %p175 = pneg %p174
      // Predicated region
      $region29: #{tpu_custom_call.1} parent=5 // pred_check
        _
      $region30: #{tpu_custom_call.1} parent=5 // pred_check_branch
        %177 = sbr.rel (%p174) target = $region32
      $region31: #{tpu_custom_call.1} parent=5 // pred_region
        %s178 = ssub.s32 %s17, 1
        %s179 = sand.u32 %s30, 1
        %s180 = scalar_lea.sflag [#allocation3], %s179
        %s181 = sand.u32 %s30, 1
        %s182 = smul.addr %s181, 64
        %s183 = scalar_lea.vmem [#allocation2], %s182
        // Predicated region
        $region33: #{tpu_custom_call.1} parent=31 // pred_check
          %p184 = pneg %p43
        $region34: #{tpu_custom_call.1} parent=31 // pred_check_branch
          %186 = sbr.rel (%p184) target = $region36
        $region35: #{tpu_custom_call.1} parent=31 // pred_region
          %188 = dma.done %s180, 1024
        $region36: #{tpu_custom_call.1} parent=31 // pred_fallthru
          _
        // Predicated region
        $region37: #{tpu_custom_call.1} parent=31 // pred_check
          %p189 = pneg %p64
        $region38: #{tpu_custom_call.1} parent=31 // pred_check_branch
          %191 = sbr.rel (%p189) target = $region40
        $region39: #{tpu_custom_call.1} parent=31 // pred_region
          %193 = dma.done [#allocation5], 16
        $region40: #{tpu_custom_call.1} parent=31 // pred_fallthru
          _
        // Predicated region
        $region41: #{tpu_custom_call.1} parent=31 // pred_check
          %p194 = pneg %p85
        $region42: #{tpu_custom_call.1} parent=31 // pred_check_branch
          %196 = sbr.rel (%p194) target = $region44
        $region43: #{tpu_custom_call.1} parent=31 // pred_region
          %198 = dma.done [#allocation6], 16
        $region44: #{tpu_custom_call.1} parent=31 // pred_fallthru
          _
        %199 = sfence
        %s200 = sand.u32 %s30, 1
        %s201 = scalar_lea.sflag [#allocation3], %s200
        %s202 = sand.u32 %s30, 1
        %s203 = smul.addr %s202, 64
        %s204 = scalar_lea.vmem [#allocation2], %s203
        %p205 = pneg %p43
        %p206 = pneg %p40
        %p207 = pneg %p64
        %p208 = pneg %p61
        %p209 = pneg %p85
        %p210 = pneg %p82
        %p211 = pneg %p111
        %p212 = pneg %p108
        %s213 = sand.u32 %s98, 1
        %s214 = scalar_lea.sflag [#allocation4], %s213
        %s215 = sand.u32 %s98, 1
        %s216 = smul.addr %s215, 16
        %s217 = scalar_lea.vmem [#allocation9], %s216
        %v218 = vld [vmem:[%s183] sm:$0xff]
        %v219 = vld [vmem:[%s183 + $0x8] sm:$0xff]
        %v220 = vld [vmem:[%s183 + $0x10] sm:$0xff]
        %v221 = vld [vmem:[%s183 + $0x18] sm:$0xff]
        %v222 = vld [vmem:[%s183 + $0x20] sm:$0xff]
        %v223 = vld [vmem:[%s183 + $0x28] sm:$0xff]
        %v224 = vld [vmem:[%s183 + $0x30] sm:$0xff]
        %v225 = vld [vmem:[%s183 + $0x38] sm:$0xff]
        %vm226 = vcmask 130048
        %v227 = vsel %vm226, %v218, -inf
        %v228 = vsel %vm226, %v220, -inf
        %v229 = vsel %vm226, %v222, -inf
        %v230 = vmax.f32 %v227, %v229
        %v231 = vsel %vm226, %v224, -inf
        %v232 = vmax.f32 %v228, %v231
        %v233 = vmax.f32 %v230, %v232
        %v234 = vsel %vm226, %v219, -inf
        %v235 = vsel %vm226, %v221, -inf
        %v236 = vsel %vm226, %v223, -inf
        %v237 = vmax.f32 %v234, %v236
        %v238 = vsel %vm226, %v225, -inf
        %v239 = vmax.f32 %v235, %v238
        %v240 = vmax.f32 %v237, %v239
        %v241 = vsel %vm226, %v218, 0.0
        %v242 = vsel %vm226, %v220, 0.0
        %v243 = vadd.f32 %v241, %v242
        %v244 = vsel %vm226, %v222, 0.0
        %v245 = vadd.f32 %v243, %v244
        %v246 = vsel %vm226, %v224, 0.0
        %v247 = vadd.f32 %v245, %v246
        %v248 = vsel %vm226, %v219, 0.0
        %v249 = vsel %vm226, %v221, 0.0
        %v250 = vadd.f32 %v248, %v249
        %v251 = vsel %vm226, %v223, 0.0
        %v252 = vadd.f32 %v250, %v251
        %v253 = vsel %vm226, %v225, 0.0
        %v254 = vadd.f32 %v252, %v253
        %v255 = vmul.f32 %v247, 0.25
        %v256 = vmul.f32 %v254, 0.25
        %s257 = sld [smem:[#allocation8]]
        %s258 = sld [smem:[#allocation8 + $0x1]]
        %261 = vrot.lane.b32.xlu0 %v233, 3
        %v262 = vpop.permute.xlu0 %261
        %263 = vrot.lane.b32.xlu0 %v240, 3
        %v264 = vpop.permute.xlu0 %263
        %vm267 = vcmask 23552
        %v268 = vsel %vm267, 0.0, %v262
        %v269 = vsel %vm267, 0.0, %v264
        %vm270 = vcmask 154624
        %v271 = vsel %vm270, %v268, 0.0
        %v272 = vsel %vm270, %v269, 0.0
        %vm275 = vcmask 1042432
        %v276 = vrot.slane %v271, 5
        %v277 = vrot.slane %v272, 5
        %v278 = vsel %vm275, %v276, %v277
        %v282 = vsel %vm275, 0.0, %v276
        %v283 = vsel %vm275, %v277, 0.0
        %s284 = sld [smem:[#allocation7]]
        %v285 = vstv %s284
        %v286 = vmul.f32 %v285, %v282
        %v287 = vmul.f32 %v285, %v278
        %v288 = vadd.f32 %v286, 0.0
        %v289 = vadd.f32 %v287, 0.0
        %s290 = sld [smem:[#allocation7 + $0x7]]
        %v291 = vstv %s290
        %v292 = vmul.f32 %v291, %v282
        %v293 = vmul.f32 %v291, %v278
        %v294 = vmul.f32 %v291, %v283
        %vm298 = vcmask 1046528
        %v299 = vrot.slane %v292, 1
        %v300 = vrot.slane %v293, 1
        %v301 = vsel %vm298, %v299, %v300
        %v302 = vrot.slane %v294, 1
        %v303 = vsel %vm298, %v300, %v302
        %v306 = vadd.f32 %v288, %v301
        %v307 = vadd.f32 %v289, %v303
        %s308 = sld [smem:[#allocation7 + $0xe]]
        %v309 = vstv %s308
        %v310 = vmul.f32 %v309, %v282
        %v311 = vmul.f32 %v309, %v278
        %v312 = vmul.f32 %v309, %v283
        %vm316 = vcmask 1045504
        %v317 = vrot.slane %v310, 2
        %v318 = vrot.slane %v311, 2
        %v319 = vsel %vm316, %v317, %v318
        %v320 = vrot.slane %v312, 2
        %v321 = vsel %vm316, %v318, %v320
        %v324 = vadd.f32 %v306, %v319
        %v325 = vadd.f32 %v307, %v321
        %s326 = sld [smem:[#allocation7 + $0x15]]
        %v327 = vstv %s326
        %v328 = vmul.f32 %v327, %v282
        %v329 = vmul.f32 %v327, %v278
        %v330 = vmul.f32 %v327, %v283
        %vm334 = vcmask 1044480
        %v335 = vrot.slane %v328, 3
        %v336 = vrot.slane %v329, 3
        %v337 = vsel %vm334, %v335, %v336
        %v338 = vrot.slane %v330, 3
        %v339 = vsel %vm334, %v336, %v338
        %v342 = vadd.f32 %v324, %v337
        %v343 = vadd.f32 %v325, %v339
        %s344 = sld [smem:[#allocation7 + $0x1c]]
        %v345 = vstv %s344
        %v346 = vmul.f32 %v345, %v282
        %v347 = vmul.f32 %v345, %v278
        %v348 = vmul.f32 %v345, %v283
        %vm352 = vcmask 1043456
        %v353 = vrot.slane %v346, 4
        %v354 = vrot.slane %v347, 4
        %v355 = vsel %vm352, %v353, %v354
        %v356 = vrot.slane %v348, 4
        %v357 = vsel %vm352, %v354, %v356
        %v360 = vadd.f32 %v342, %v355
        %v361 = vadd.f32 %v343, %v357
        %s362 = sld [smem:[#allocation7 + $0x23]]
        %v363 = vstv %s362
        %v364 = vmul.f32 %v363, %v282
        %v365 = vmul.f32 %v363, %v278
        %v366 = vmul.f32 %v363, %v283
        %v370 = vrot.slane %v364, 5
        %v371 = vrot.slane %v365, 5
        %v372 = vsel %vm275, %v370, %v371
        %v373 = vrot.slane %v366, 5
        %v374 = vsel %vm275, %v371, %v373
        %v377 = vadd.f32 %v360, %v372
        %v378 = vadd.f32 %v361, %v374
        %s379 = sld [smem:[#allocation7 + $0x2a]]
        %v380 = vstv %s379
        %v381 = vmul.f32 %v380, %v282
        %v382 = vmul.f32 %v380, %v278
        %v383 = vmul.f32 %v380, %v283
        %vm387 = vcmask 1041408
        %v388 = vrot.slane %v381, 6
        %v389 = vrot.slane %v382, 6
        %v390 = vsel %vm387, %v388, %v389
        %v391 = vrot.slane %v383, 6
        %v392 = vsel %vm387, %v389, %v391
        %v395 = vadd.f32 %v377, %v390
        %v396 = vadd.f32 %v378, %v392
        %s397 = sld [smem:[#allocation7 + $0x1]]
        %v398 = vstv %s397
        %v399 = vmul.f32 %v398, %v282
        %v400 = vmul.f32 %v398, %v278
        %403 = vrot.lane.b32.xlu0 %v399, 127
        %v404 = vpop.permute.xlu0 %403
        %405 = vrot.lane.b32.xlu0 %v400, 127
        %v406 = vpop.permute.xlu0 %405
        %v409 = vadd.f32 %v395, %v404
        %v410 = vadd.f32 %v396, %v406
        %s411 = sld [smem:[#allocation7 + $0x8]]
        %v412 = vstv %s411
        %v413 = vmul.f32 %v412, %v282
        %v414 = vmul.f32 %v412, %v278
        %v415 = vmul.f32 %v412, %v283
        %v419 = vrot.slane %v413, 1
        %v420 = vrot.slane %v414, 1
        %v421 = vsel %vm298, %v419, %v420
        %v422 = vrot.slane %v415, 1
        %v423 = vsel %vm298, %v420, %v422
        %424 = vrot.lane.b32.xlu0 %v421, 127
        %v425 = vpop.permute.xlu0 %424
        %426 = vrot.lane.b32.xlu0 %v423, 127
        %v427 = vpop.permute.xlu0 %426
        %v430 = vadd.f32 %v409, %v425
        %v431 = vadd.f32 %v410, %v427
        %s432 = sld [smem:[#allocation7 + $0xf]]
        %v433 = vstv %s432
        %v434 = vmul.f32 %v433, %v282
        %v435 = vmul.f32 %v433, %v278
        %v436 = vmul.f32 %v433, %v283
        %v440 = vrot.slane %v434, 2
        %v441 = vrot.slane %v435, 2
        %v442 = vsel %vm316, %v440, %v441
        %v443 = vrot.slane %v436, 2
        %v444 = vsel %vm316, %v441, %v443
        %445 = vrot.lane.b32.xlu0 %v442, 127
        %v446 = vpop.permute.xlu0 %445
        %447 = vrot.lane.b32.xlu0 %v444, 127
        %v448 = vpop.permute.xlu0 %447
        %v451 = vadd.f32 %v430, %v446
        %v452 = vadd.f32 %v431, %v448
        %s453 = sld [smem:[#allocation7 + $0x16]]
        %v454 = vstv %s453
        %v455 = vmul.f32 %v454, %v282
        %v456 = vmul.f32 %v454, %v278
        %v457 = vmul.f32 %v454, %v283
        %v461 = vrot.slane %v455, 3
        %v462 = vrot.slane %v456, 3
        %v463 = vsel %vm334, %v461, %v462
        %v464 = vrot.slane %v457, 3
        %v465 = vsel %vm334, %v462, %v464
        %466 = vrot.lane.b32.xlu0 %v463, 127
        %v467 = vpop.permute.xlu0 %466
        %468 = vrot.lane.b32.xlu0 %v465, 127
        %v469 = vpop.permute.xlu0 %468
        %v472 = vadd.f32 %v451, %v467
        %v473 = vadd.f32 %v452, %v469
        %s474 = sld [smem:[#allocation7 + $0x1d]]
        %v475 = vstv %s474
        %v476 = vmul.f32 %v475, %v282
        %v477 = vmul.f32 %v475, %v278
        %v478 = vmul.f32 %v475, %v283
        %v482 = vrot.slane %v476, 4
        %v483 = vrot.slane %v477, 4
        %v484 = vsel %vm352, %v482, %v483
        %v485 = vrot.slane %v478, 4
        %v486 = vsel %vm352, %v483, %v485
        %487 = vrot.lane.b32.xlu0 %v484, 127
        %v488 = vpop.permute.xlu0 %487
        %489 = vrot.lane.b32.xlu0 %v486, 127
        %v490 = vpop.permute.xlu0 %489
        %v493 = vadd.f32 %v472, %v488
        %v494 = vadd.f32 %v473, %v490
        %s495 = sld [smem:[#allocation7 + $0x24]]
        %v496 = vstv %s495
        %v497 = vmul.f32 %v496, %v282
        %v498 = vmul.f32 %v496, %v278
        %v499 = vmul.f32 %v496, %v283
        %v503 = vrot.slane %v497, 5
        %v504 = vrot.slane %v498, 5
        %v505 = vsel %vm275, %v503, %v504
        %v506 = vrot.slane %v499, 5
        %v507 = vsel %vm275, %v504, %v506
        %508 = vrot.lane.b32.xlu0 %v505, 127
        %v509 = vpop.permute.xlu0 %508
        %510 = vrot.lane.b32.xlu0 %v507, 127
        %v511 = vpop.permute.xlu0 %510
        %v514 = vadd.f32 %v493, %v509
        %v515 = vadd.f32 %v494, %v511
        %s516 = sld [smem:[#allocation7 + $0x2b]]
        %v517 = vstv %s516
        %v518 = vmul.f32 %v517, %v282
        %v519 = vmul.f32 %v517, %v278
        %v520 = vmul.f32 %v517, %v283
        %v524 = vrot.slane %v518, 6
        %v525 = vrot.slane %v519, 6
        %v526 = vsel %vm387, %v524, %v525
        %v527 = vrot.slane %v520, 6
        %v528 = vsel %vm387, %v525, %v527
        %529 = vrot.lane.b32.xlu0 %v526, 127
        %v530 = vpop.permute.xlu0 %529
        %531 = vrot.lane.b32.xlu0 %v528, 127
        %v532 = vpop.permute.xlu0 %531
        %v535 = vadd.f32 %v514, %v530
        %v536 = vadd.f32 %v515, %v532
        %s537 = sld [smem:[#allocation7 + $0x2]]
        %v538 = vstv %s537
        %v539 = vmul.f32 %v538, %v282
        %v540 = vmul.f32 %v538, %v278
        %543 = vrot.lane.b32.xlu0 %v539, 126
        %v544 = vpop.permute.xlu0 %543
        %545 = vrot.lane.b32.xlu0 %v540, 126
        %v546 = vpop.permute.xlu0 %545
        %v549 = vadd.f32 %v535, %v544
        %v550 = vadd.f32 %v536, %v546
        %s551 = sld [smem:[#allocation7 + $0x9]]
        %v552 = vstv %s551
        %v553 = vmul.f32 %v552, %v282
        %v554 = vmul.f32 %v552, %v278
        %v555 = vmul.f32 %v552, %v283
        %v559 = vrot.slane %v553, 1
        %v560 = vrot.slane %v554, 1
        %v561 = vsel %vm298, %v559, %v560
        %v562 = vrot.slane %v555, 1
        %v563 = vsel %vm298, %v560, %v562
        %564 = vrot.lane.b32.xlu0 %v561, 126
        %v565 = vpop.permute.xlu0 %564
        %566 = vrot.lane.b32.xlu0 %v563, 126
        %v567 = vpop.permute.xlu0 %566
        %v570 = vadd.f32 %v549, %v565
        %v571 = vadd.f32 %v550, %v567
        %s572 = sld [smem:[#allocation7 + $0x10]]
        %v573 = vstv %s572
        %v574 = vmul.f32 %v573, %v282
        %v575 = vmul.f32 %v573, %v278
        %v576 = vmul.f32 %v573, %v283
        %v580 = vrot.slane %v574, 2
        %v581 = vrot.slane %v575, 2
        %v582 = vsel %vm316, %v580, %v581
        %v583 = vrot.slane %v576, 2
        %v584 = vsel %vm316, %v581, %v583
        %585 = vrot.lane.b32.xlu0 %v582, 126
        %v586 = vpop.permute.xlu0 %585
        %587 = vrot.lane.b32.xlu0 %v584, 126
        %v588 = vpop.permute.xlu0 %587
        %v591 = vadd.f32 %v570, %v586
        %v592 = vadd.f32 %v571, %v588
        %s593 = sld [smem:[#allocation7 + $0x17]]
        %v594 = vstv %s593
        %v595 = vmul.f32 %v594, %v282
        %v596 = vmul.f32 %v594, %v278
        %v597 = vmul.f32 %v594, %v283
        %v601 = vrot.slane %v595, 3
        %v602 = vrot.slane %v596, 3
        %v603 = vsel %vm334, %v601, %v602
        %v604 = vrot.slane %v597, 3
        %v605 = vsel %vm334, %v602, %v604
        %606 = vrot.lane.b32.xlu0 %v603, 126
        %v607 = vpop.permute.xlu0 %606
        %608 = vrot.lane.b32.xlu0 %v605, 126
        %v609 = vpop.permute.xlu0 %608
        %v612 = vadd.f32 %v591, %v607
        %v613 = vadd.f32 %v592, %v609
        %s614 = sld [smem:[#allocation7 + $0x1e]]
        %v615 = vstv %s614
        %v616 = vmul.f32 %v615, %v282
        %v617 = vmul.f32 %v615, %v278
        %v618 = vmul.f32 %v615, %v283
        %v622 = vrot.slane %v616, 4
        %v623 = vrot.slane %v617, 4
        %v624 = vsel %vm352, %v622, %v623
        %v625 = vrot.slane %v618, 4
        %v626 = vsel %vm352, %v623, %v625
        %627 = vrot.lane.b32.xlu0 %v624, 126
        %v628 = vpop.permute.xlu0 %627
        %629 = vrot.lane.b32.xlu0 %v626, 126
        %v630 = vpop.permute.xlu0 %629
        %v633 = vadd.f32 %v612, %v628
        %v634 = vadd.f32 %v613, %v630
        %s635 = sld [smem:[#allocation7 + $0x25]]
        %v636 = vstv %s635
        %v637 = vmul.f32 %v636, %v282
        %v638 = vmul.f32 %v636, %v278
        %v639 = vmul.f32 %v636, %v283
        %v643 = vrot.slane %v637, 5
        %v644 = vrot.slane %v638, 5
        %v645 = vsel %vm275, %v643, %v644
        %v646 = vrot.slane %v639, 5
        %v647 = vsel %vm275, %v644, %v646
        %648 = vrot.lane.b32.xlu0 %v645, 126
        %v649 = vpop.permute.xlu0 %648
        %650 = vrot.lane.b32.xlu0 %v647, 126
        %v651 = vpop.permute.xlu0 %650
        %v654 = vadd.f32 %v633, %v649
        %v655 = vadd.f32 %v634, %v651
        %s656 = sld [smem:[#allocation7 + $0x2c]]
        %v657 = vstv %s656
        %v658 = vmul.f32 %v657, %v282
        %v659 = vmul.f32 %v657, %v278
        %v660 = vmul.f32 %v657, %v283
        %v664 = vrot.slane %v658, 6
        %v665 = vrot.slane %v659, 6
        %v666 = vsel %vm387, %v664, %v665
        %v667 = vrot.slane %v660, 6
        %v668 = vsel %vm387, %v665, %v667
        %669 = vrot.lane.b32.xlu0 %v666, 126
        %v670 = vpop.permute.xlu0 %669
        %671 = vrot.lane.b32.xlu0 %v668, 126
        %v672 = vpop.permute.xlu0 %671
        %v675 = vadd.f32 %v654, %v670
        %v676 = vadd.f32 %v655, %v672
        %s677 = sld [smem:[#allocation7 + $0x3]]
        %v678 = vstv %s677
        %v679 = vmul.f32 %v678, %v282
        %v680 = vmul.f32 %v678, %v278
        %683 = vrot.lane.b32.xlu0 %v679, 125
        %v684 = vpop.permute.xlu0 %683
        %685 = vrot.lane.b32.xlu0 %v680, 125
        %v686 = vpop.permute.xlu0 %685
        %v689 = vadd.f32 %v675, %v684
        %v690 = vadd.f32 %v676, %v686
        %s691 = sld [smem:[#allocation7 + $0xa]]
        %v692 = vstv %s691
        %v693 = vmul.f32 %v692, %v282
        %v694 = vmul.f32 %v692, %v278
        %v695 = vmul.f32 %v692, %v283
        %v699 = vrot.slane %v693, 1
        %v700 = vrot.slane %v694, 1
        %v701 = vsel %vm298, %v699, %v700
        %v702 = vrot.slane %v695, 1
        %v703 = vsel %vm298, %v700, %v702
        %704 = vrot.lane.b32.xlu0 %v701, 125
        %v705 = vpop.permute.xlu0 %704
        %706 = vrot.lane.b32.xlu0 %v703, 125
        %v707 = vpop.permute.xlu0 %706
        %v710 = vadd.f32 %v689, %v705
        %v711 = vadd.f32 %v690, %v707
        %s712 = sld [smem:[#allocation7 + $0x11]]
        %v713 = vstv %s712
        %v714 = vmul.f32 %v713, %v282
        %v715 = vmul.f32 %v713, %v278
        %v716 = vmul.f32 %v713, %v283
        %v720 = vrot.slane %v714, 2
        %v721 = vrot.slane %v715, 2
        %v722 = vsel %vm316, %v720, %v721
        %v723 = vrot.slane %v716, 2
        %v724 = vsel %vm316, %v721, %v723
        %725 = vrot.lane.b32.xlu0 %v722, 125
        %v726 = vpop.permute.xlu0 %725
        %727 = vrot.lane.b32.xlu0 %v724, 125
        %v728 = vpop.permute.xlu0 %727
        %v731 = vadd.f32 %v710, %v726
        %v732 = vadd.f32 %v711, %v728
        %s733 = sld [smem:[#allocation7 + $0x18]]
        %v734 = vstv %s733
        %v735 = vmul.f32 %v734, %v282
        %v736 = vmul.f32 %v734, %v278
        %v737 = vmul.f32 %v734, %v283
        %v741 = vrot.slane %v735, 3
        %v742 = vrot.slane %v736, 3
        %v743 = vsel %vm334, %v741, %v742
        %v744 = vrot.slane %v737, 3
        %v745 = vsel %vm334, %v742, %v744
        %746 = vrot.lane.b32.xlu0 %v743, 125
        %v747 = vpop.permute.xlu0 %746
        %748 = vrot.lane.b32.xlu0 %v745, 125
        %v749 = vpop.permute.xlu0 %748
        %v752 = vadd.f32 %v731, %v747
        %v753 = vadd.f32 %v732, %v749
        %s754 = sld [smem:[#allocation7 + $0x1f]]
        %v755 = vstv %s754
        %v756 = vmul.f32 %v755, %v282
        %v757 = vmul.f32 %v755, %v278
        %v758 = vmul.f32 %v755, %v283
        %v762 = vrot.slane %v756, 4
        %v763 = vrot.slane %v757, 4
        %v764 = vsel %vm352, %v762, %v763
        %v765 = vrot.slane %v758, 4
        %v766 = vsel %vm352, %v763, %v765
        %767 = vrot.lane.b32.xlu0 %v764, 125
        %v768 = vpop.permute.xlu0 %767
        %769 = vrot.lane.b32.xlu0 %v766, 125
        %v770 = vpop.permute.xlu0 %769
        %v773 = vadd.f32 %v752, %v768
        %v774 = vadd.f32 %v753, %v770
        %s775 = sld [smem:[#allocation7 + $0x26]]
        %v776 = vstv %s775
        %v777 = vmul.f32 %v776, %v282
        %v778 = vmul.f32 %v776, %v278
        %v779 = vmul.f32 %v776, %v283
        %v783 = vrot.slane %v777, 5
        %v784 = vrot.slane %v778, 5
        %v785 = vsel %vm275, %v783, %v784
        %v786 = vrot.slane %v779, 5
        %v787 = vsel %vm275, %v784, %v786
        %788 = vrot.lane.b32.xlu0 %v785, 125
        %v789 = vpop.permute.xlu0 %788
        %790 = vrot.lane.b32.xlu0 %v787, 125
        %v791 = vpop.permute.xlu0 %790
        %v794 = vadd.f32 %v773, %v789
        %v795 = vadd.f32 %v774, %v791
        %s796 = sld [smem:[#allocation7 + $0x2d]]
        %v797 = vstv %s796
        %v798 = vmul.f32 %v797, %v282
        %v799 = vmul.f32 %v797, %v278
        %v800 = vmul.f32 %v797, %v283
        %v804 = vrot.slane %v798, 6
        %v805 = vrot.slane %v799, 6
        %v806 = vsel %vm387, %v804, %v805
        %v807 = vrot.slane %v800, 6
        %v808 = vsel %vm387, %v805, %v807
        %809 = vrot.lane.b32.xlu0 %v806, 125
        %v810 = vpop.permute.xlu0 %809
        %811 = vrot.lane.b32.xlu0 %v808, 125
        %v812 = vpop.permute.xlu0 %811
        %v815 = vadd.f32 %v794, %v810
        %v816 = vadd.f32 %v795, %v812
        %s817 = sld [smem:[#allocation7 + $0x4]]
        %v818 = vstv %s817
        %v819 = vmul.f32 %v818, %v282
        %v820 = vmul.f32 %v818, %v278
        %823 = vrot.lane.b32.xlu0 %v819, 124
        %v824 = vpop.permute.xlu0 %823
        %825 = vrot.lane.b32.xlu0 %v820, 124
        %v826 = vpop.permute.xlu0 %825
        %v829 = vadd.f32 %v815, %v824
        %v830 = vadd.f32 %v816, %v826
        %s831 = sld [smem:[#allocation7 + $0xb]]
        %v832 = vstv %s831
        %v833 = vmul.f32 %v832, %v282
        %v834 = vmul.f32 %v832, %v278
        %v835 = vmul.f32 %v832, %v283
        %v839 = vrot.slane %v833, 1
        %v840 = vrot.slane %v834, 1
        %v841 = vsel %vm298, %v839, %v840
        %v842 = vrot.slane %v835, 1
        %v843 = vsel %vm298, %v840, %v842
        %844 = vrot.lane.b32.xlu0 %v841, 124
        %v845 = vpop.permute.xlu0 %844
        %846 = vrot.lane.b32.xlu0 %v843, 124
        %v847 = vpop.permute.xlu0 %846
        %v850 = vadd.f32 %v829, %v845
        %v851 = vadd.f32 %v830, %v847
        %s852 = sld [smem:[#allocation7 + $0x12]]
        %v853 = vstv %s852
        %v854 = vmul.f32 %v853, %v282
        %v855 = vmul.f32 %v853, %v278
        %v856 = vmul.f32 %v853, %v283
        %v860 = vrot.slane %v854, 2
        %v861 = vrot.slane %v855, 2
        %v862 = vsel %vm316, %v860, %v861
        %v863 = vrot.slane %v856, 2
        %v864 = vsel %vm316, %v861, %v863
        %865 = vrot.lane.b32.xlu0 %v862, 124
        %v866 = vpop.permute.xlu0 %865
        %867 = vrot.lane.b32.xlu0 %v864, 124
        %v868 = vpop.permute.xlu0 %867
        %v871 = vadd.f32 %v850, %v866
        %v872 = vadd.f32 %v851, %v868
        %s873 = sld [smem:[#allocation7 + $0x19]]
        %v874 = vstv %s873
        %v875 = vmul.f32 %v874, %v282
        %v876 = vmul.f32 %v874, %v278
        %v877 = vmul.f32 %v874, %v283
        %v881 = vrot.slane %v875, 3
        %v882 = vrot.slane %v876, 3
        %v883 = vsel %vm334, %v881, %v882
        %v884 = vrot.slane %v877, 3
        %v885 = vsel %vm334, %v882, %v884
        %886 = vrot.lane.b32.xlu0 %v883, 124
        %v887 = vpop.permute.xlu0 %886
        %888 = vrot.lane.b32.xlu0 %v885, 124
        %v889 = vpop.permute.xlu0 %888
        %v892 = vadd.f32 %v871, %v887
        %v893 = vadd.f32 %v872, %v889
        %s894 = sld [smem:[#allocation7 + $0x20]]
        %v895 = vstv %s894
        %v896 = vmul.f32 %v895, %v282
        %v897 = vmul.f32 %v895, %v278
        %v898 = vmul.f32 %v895, %v283
        %v902 = vrot.slane %v896, 4
        %v903 = vrot.slane %v897, 4
        %v904 = vsel %vm352, %v902, %v903
        %v905 = vrot.slane %v898, 4
        %v906 = vsel %vm352, %v903, %v905
        %907 = vrot.lane.b32.xlu0 %v904, 124
        %v908 = vpop.permute.xlu0 %907
        %909 = vrot.lane.b32.xlu0 %v906, 124
        %v910 = vpop.permute.xlu0 %909
        %v913 = vadd.f32 %v892, %v908
        %v914 = vadd.f32 %v893, %v910
        %s915 = sld [smem:[#allocation7 + $0x27]]
        %v916 = vstv %s915
        %v917 = vmul.f32 %v916, %v282
        %v918 = vmul.f32 %v916, %v278
        %v919 = vmul.f32 %v916, %v283
        %v923 = vrot.slane %v917, 5
        %v924 = vrot.slane %v918, 5
        %v925 = vsel %vm275, %v923, %v924
        %v926 = vrot.slane %v919, 5
        %v927 = vsel %vm275, %v924, %v926
        %928 = vrot.lane.b32.xlu0 %v925, 124
        %v929 = vpop.permute.xlu0 %928
        %930 = vrot.lane.b32.xlu0 %v927, 124
        %v931 = vpop.permute.xlu0 %930
        %v934 = vadd.f32 %v913, %v929
        %v935 = vadd.f32 %v914, %v931
        %s936 = sld [smem:[#allocation7 + $0x2e]]
        %v937 = vstv %s936
        %v938 = vmul.f32 %v937, %v282
        %v939 = vmul.f32 %v937, %v278
        %v940 = vmul.f32 %v937, %v283
        %v944 = vrot.slane %v938, 6
        %v945 = vrot.slane %v939, 6
        %v946 = vsel %vm387, %v944, %v945
        %v947 = vrot.slane %v940, 6
        %v948 = vsel %vm387, %v945, %v947
        %949 = vrot.lane.b32.xlu0 %v946, 124
        %v950 = vpop.permute.xlu0 %949
        %951 = vrot.lane.b32.xlu0 %v948, 124
        %v952 = vpop.permute.xlu0 %951
        %v955 = vadd.f32 %v934, %v950
        %v956 = vadd.f32 %v935, %v952
        %s957 = sld [smem:[#allocation7 + $0x5]]
        %v958 = vstv %s957
        %v959 = vmul.f32 %v958, %v282
        %v960 = vmul.f32 %v958, %v278
        %963 = vrot.lane.b32.xlu0 %v959, 123
        %v964 = vpop.permute.xlu0 %963
        %965 = vrot.lane.b32.xlu0 %v960, 123
        %v966 = vpop.permute.xlu0 %965
        %v969 = vadd.f32 %v955, %v964
        %v970 = vadd.f32 %v956, %v966
        %s971 = sld [smem:[#allocation7 + $0xc]]
        %v972 = vstv %s971
        %v973 = vmul.f32 %v972, %v282
        %v974 = vmul.f32 %v972, %v278
        %v975 = vmul.f32 %v972, %v283
        %v979 = vrot.slane %v973, 1
        %v980 = vrot.slane %v974, 1
        %v981 = vsel %vm298, %v979, %v980
        %v982 = vrot.slane %v975, 1
        %v983 = vsel %vm298, %v980, %v982
        %984 = vrot.lane.b32.xlu0 %v981, 123
        %v985 = vpop.permute.xlu0 %984
        %986 = vrot.lane.b32.xlu0 %v983, 123
        %v987 = vpop.permute.xlu0 %986
        %v990 = vadd.f32 %v969, %v985
        %v991 = vadd.f32 %v970, %v987
        %s992 = sld [smem:[#allocation7 + $0x13]]
        %v993 = vstv %s992
        %v994 = vmul.f32 %v993, %v282
        %v995 = vmul.f32 %v993, %v278
        %v996 = vmul.f32 %v993, %v283
        %v1000 = vrot.slane %v994, 2
        %v1001 = vrot.slane %v995, 2
        %v1002 = vsel %vm316, %v1000, %v1001
        %v1003 = vrot.slane %v996, 2
        %v1004 = vsel %vm316, %v1001, %v1003
        %1005 = vrot.lane.b32.xlu0 %v1002, 123
        %v1006 = vpop.permute.xlu0 %1005
        %1007 = vrot.lane.b32.xlu0 %v1004, 123
        %v1008 = vpop.permute.xlu0 %1007
        %v1011 = vadd.f32 %v990, %v1006
        %v1012 = vadd.f32 %v991, %v1008
        %s1013 = sld [smem:[#allocation7 + $0x1a]]
        %v1014 = vstv %s1013
        %v1015 = vmul.f32 %v1014, %v282
        %v1016 = vmul.f32 %v1014, %v278
        %v1017 = vmul.f32 %v1014, %v283
        %v1021 = vrot.slane %v1015, 3
        %v1022 = vrot.slane %v1016, 3
        %v1023 = vsel %vm334, %v1021, %v1022
        %v1024 = vrot.slane %v1017, 3
        %v1025 = vsel %vm334, %v1022, %v1024
        %1026 = vrot.lane.b32.xlu0 %v1023, 123
        %v1027 = vpop.permute.xlu0 %1026
        %1028 = vrot.lane.b32.xlu0 %v1025, 123
        %v1029 = vpop.permute.xlu0 %1028
        %v1032 = vadd.f32 %v1011, %v1027
        %v1033 = vadd.f32 %v1012, %v1029
        %s1034 = sld [smem:[#allocation7 + $0x21]]
        %v1035 = vstv %s1034
        %v1036 = vmul.f32 %v1035, %v282
        %v1037 = vmul.f32 %v1035, %v278
        %v1038 = vmul.f32 %v1035, %v283
        %v1042 = vrot.slane %v1036, 4
        %v1043 = vrot.slane %v1037, 4
        %v1044 = vsel %vm352, %v1042, %v1043
        %v1045 = vrot.slane %v1038, 4
        %v1046 = vsel %vm352, %v1043, %v1045
        %1047 = vrot.lane.b32.xlu0 %v1044, 123
        %v1048 = vpop.permute.xlu0 %1047
        %1049 = vrot.lane.b32.xlu0 %v1046, 123
        %v1050 = vpop.permute.xlu0 %1049
        %v1053 = vadd.f32 %v1032, %v1048
        %v1054 = vadd.f32 %v1033, %v1050
        %s1055 = sld [smem:[#allocation7 + $0x28]]
        %v1056 = vstv %s1055
        %v1057 = vmul.f32 %v1056, %v282
        %v1058 = vmul.f32 %v1056, %v278
        %v1059 = vmul.f32 %v1056, %v283
        %v1063 = vrot.slane %v1057, 5
        %v1064 = vrot.slane %v1058, 5
        %v1065 = vsel %vm275, %v1063, %v1064
        %v1066 = vrot.slane %v1059, 5
        %v1067 = vsel %vm275, %v1064, %v1066
        %1068 = vrot.lane.b32.xlu0 %v1065, 123
        %v1069 = vpop.permute.xlu0 %1068
        %1070 = vrot.lane.b32.xlu0 %v1067, 123
        %v1071 = vpop.permute.xlu0 %1070
        %v1074 = vadd.f32 %v1053, %v1069
        %v1075 = vadd.f32 %v1054, %v1071
        %s1076 = sld [smem:[#allocation7 + $0x2f]]
        %v1077 = vstv %s1076
        %v1078 = vmul.f32 %v1077, %v282
        %v1079 = vmul.f32 %v1077, %v278
        %v1080 = vmul.f32 %v1077, %v283
        %v1084 = vrot.slane %v1078, 6
        %v1085 = vrot.slane %v1079, 6
        %v1086 = vsel %vm387, %v1084, %v1085
        %v1087 = vrot.slane %v1080, 6
        %v1088 = vsel %vm387, %v1085, %v1087
        %1089 = vrot.lane.b32.xlu0 %v1086, 123
        %v1090 = vpop.permute.xlu0 %1089
        %1091 = vrot.lane.b32.xlu0 %v1088, 123
        %v1092 = vpop.permute.xlu0 %1091
        %v1095 = vadd.f32 %v1074, %v1090
        %v1096 = vadd.f32 %v1075, %v1092
        %s1097 = sld [smem:[#allocation7 + $0x6]]
        %v1098 = vstv %s1097
        %v1099 = vmul.f32 %v1098, %v282
        %v1100 = vmul.f32 %v1098, %v278
        %1103 = vrot.lane.b32.xlu0 %v1099, 122
        %v1104 = vpop.permute.xlu0 %1103
        %1105 = vrot.lane.b32.xlu0 %v1100, 122
        %v1106 = vpop.permute.xlu0 %1105
        %v1109 = vadd.f32 %v1095, %v1104
        %v1110 = vadd.f32 %v1096, %v1106
        %s1111 = sld [smem:[#allocation7 + $0xd]]
        %v1112 = vstv %s1111
        %v1113 = vmul.f32 %v1112, %v282
        %v1114 = vmul.f32 %v1112, %v278
        %v1115 = vmul.f32 %v1112, %v283
        %v1119 = vrot.slane %v1113, 1
        %v1120 = vrot.slane %v1114, 1
        %v1121 = vsel %vm298, %v1119, %v1120
        %v1122 = vrot.slane %v1115, 1
        %v1123 = vsel %vm298, %v1120, %v1122
        %1124 = vrot.lane.b32.xlu0 %v1121, 122
        %v1125 = vpop.permute.xlu0 %1124
        %1126 = vrot.lane.b32.xlu0 %v1123, 122
        %v1127 = vpop.permute.xlu0 %1126
        %v1130 = vadd.f32 %v1109, %v1125
        %v1131 = vadd.f32 %v1110, %v1127
        %s1132 = sld [smem:[#allocation7 + $0x14]]
        %v1133 = vstv %s1132
        %v1134 = vmul.f32 %v1133, %v282
        %v1135 = vmul.f32 %v1133, %v278
        %v1136 = vmul.f32 %v1133, %v283
        %v1140 = vrot.slane %v1134, 2
        %v1141 = vrot.slane %v1135, 2
        %v1142 = vsel %vm316, %v1140, %v1141
        %v1143 = vrot.slane %v1136, 2
        %v1144 = vsel %vm316, %v1141, %v1143
        %1145 = vrot.lane.b32.xlu0 %v1142, 122
        %v1146 = vpop.permute.xlu0 %1145
        %1147 = vrot.lane.b32.xlu0 %v1144, 122
        %v1148 = vpop.permute.xlu0 %1147
        %v1151 = vadd.f32 %v1130, %v1146
        %v1152 = vadd.f32 %v1131, %v1148
        %s1153 = sld [smem:[#allocation7 + $0x1b]]
        %v1154 = vstv %s1153
        %v1155 = vmul.f32 %v1154, %v282
        %v1156 = vmul.f32 %v1154, %v278
        %v1157 = vmul.f32 %v1154, %v283
        %v1161 = vrot.slane %v1155, 3
        %v1162 = vrot.slane %v1156, 3
        %v1163 = vsel %vm334, %v1161, %v1162
        %v1164 = vrot.slane %v1157, 3
        %v1165 = vsel %vm334, %v1162, %v1164
        %1166 = vrot.lane.b32.xlu0 %v1163, 122
        %v1167 = vpop.permute.xlu0 %1166
        %1168 = vrot.lane.b32.xlu0 %v1165, 122
        %v1169 = vpop.permute.xlu0 %1168
        %v1172 = vadd.f32 %v1151, %v1167
        %v1173 = vadd.f32 %v1152, %v1169
        %s1174 = sld [smem:[#allocation7 + $0x22]]
        %v1175 = vstv %s1174
        %v1176 = vmul.f32 %v1175, %v282
        %v1177 = vmul.f32 %v1175, %v278
        %v1178 = vmul.f32 %v1175, %v283
        %v1182 = vrot.slane %v1176, 4
        %v1183 = vrot.slane %v1177, 4
        %v1184 = vsel %vm352, %v1182, %v1183
        %v1185 = vrot.slane %v1178, 4
        %v1186 = vsel %vm352, %v1183, %v1185
        %1187 = vrot.lane.b32.xlu0 %v1184, 122
        %v1188 = vpop.permute.xlu0 %1187
        %1189 = vrot.lane.b32.xlu0 %v1186, 122
        %v1190 = vpop.permute.xlu0 %1189
        %v1193 = vadd.f32 %v1172, %v1188
        %v1194 = vadd.f32 %v1173, %v1190
        %s1195 = sld [smem:[#allocation7 + $0x29]]
        %v1196 = vstv %s1195
        %v1197 = vmul.f32 %v1196, %v282
        %v1198 = vmul.f32 %v1196, %v278
        %v1199 = vmul.f32 %v1196, %v283
        %v1203 = vrot.slane %v1197, 5
        %v1204 = vrot.slane %v1198, 5
        %v1205 = vsel %vm275, %v1203, %v1204
        %v1206 = vrot.slane %v1199, 5
        %v1207 = vsel %vm275, %v1204, %v1206
        %1208 = vrot.lane.b32.xlu0 %v1205, 122
        %v1209 = vpop.permute.xlu0 %1208
        %1210 = vrot.lane.b32.xlu0 %v1207, 122
        %v1211 = vpop.permute.xlu0 %1210
        %v1214 = vadd.f32 %v1193, %v1209
        %v1215 = vadd.f32 %v1194, %v1211
        %s1216 = sld [smem:[#allocation7 + $0x30]]
        %v1217 = vstv %s1216
        %v1218 = vmul.f32 %v1217, %v282
        %v1219 = vmul.f32 %v1217, %v278
        %v1220 = vmul.f32 %v1217, %v283
        %v1224 = vrot.slane %v1218, 6
        %v1225 = vrot.slane %v1219, 6
        %v1226 = vsel %vm387, %v1224, %v1225
        %v1227 = vrot.slane %v1220, 6
        %v1228 = vsel %vm387, %v1225, %v1227
        %1229 = vrot.lane.b32.xlu0 %v1226, 122
        %v1230 = vpop.permute.xlu0 %1229
        %1231 = vrot.lane.b32.xlu0 %v1228, 122
        %v1232 = vpop.permute.xlu0 %1231
        %v1235 = vadd.f32 %v1214, %v1230
        %v1236 = vadd.f32 %v1215, %v1232
        %1239 = vrot.lane.b32.xlu0 %v255, 3
        %v1240 = vpop.permute.xlu0 %1239
        %1241 = vrot.lane.b32.xlu0 %v256, 3
        %v1242 = vpop.permute.xlu0 %1241
        %v1245 = vsel %vm267, 0.0, %v1240
        %v1246 = vsel %vm267, 0.0, %v1242
        %v1247 = vsel %vm270, %v1245, 0.0
        %v1248 = vsel %vm270, %v1246, 0.0
        %v1251 = vrot.slane %v1247, 5
        %v1252 = vrot.slane %v1248, 5
        %v1253 = vsel %vm275, %v1251, %v1252
        %v1257 = vsel %vm275, 0.0, %v1251
        %v1258 = vsel %vm275, %v1252, 0.0
        %s1259 = sld [smem:[#allocation7 + $0x31]]
        %v1260 = vstv %s1259
        %v1261 = vmul.f32 %v1260, %v1257
        %v1262 = vmul.f32 %v1260, %v1253
        %v1263 = vadd.f32 %v1235, %v1261
        %v1264 = vadd.f32 %v1236, %v1262
        %s1265 = sld [smem:[#allocation7 + $0x38]]
        %v1266 = vstv %s1265
        %v1267 = vmul.f32 %v1266, %v1257
        %v1268 = vmul.f32 %v1266, %v1253
        %v1269 = vmul.f32 %v1266, %v1258
        %v1273 = vrot.slane %v1267, 1
        %v1274 = vrot.slane %v1268, 1
        %v1275 = vsel %vm298, %v1273, %v1274
        %v1276 = vrot.slane %v1269, 1
        %v1277 = vsel %vm298, %v1274, %v1276
        %v1280 = vadd.f32 %v1263, %v1275
        %v1281 = vadd.f32 %v1264, %v1277
        %s1282 = sld [smem:[#allocation7 + $0x3f]]
        %v1283 = vstv %s1282
        %v1284 = vmul.f32 %v1283, %v1257
        %v1285 = vmul.f32 %v1283, %v1253
        %v1286 = vmul.f32 %v1283, %v1258
        %v1290 = vrot.slane %v1284, 2
        %v1291 = vrot.slane %v1285, 2
        %v1292 = vsel %vm316, %v1290, %v1291
        %v1293 = vrot.slane %v1286, 2
        %v1294 = vsel %vm316, %v1291, %v1293
        %v1297 = vadd.f32 %v1280, %v1292
        %v1298 = vadd.f32 %v1281, %v1294
        %s1299 = sld [smem:[#allocation7 + $0x46]]
        %v1300 = vstv %s1299
        %v1301 = vmul.f32 %v1300, %v1257
        %v1302 = vmul.f32 %v1300, %v1253
        %v1303 = vmul.f32 %v1300, %v1258
        %v1307 = vrot.slane %v1301, 3
        %v1308 = vrot.slane %v1302, 3
        %v1309 = vsel %vm334, %v1307, %v1308
        %v1310 = vrot.slane %v1303, 3
        %v1311 = vsel %vm334, %v1308, %v1310
        %v1314 = vadd.f32 %v1297, %v1309
        %v1315 = vadd.f32 %v1298, %v1311
        %s1316 = sld [smem:[#allocation7 + $0x4d]]
        %v1317 = vstv %s1316
        %v1318 = vmul.f32 %v1317, %v1257
        %v1319 = vmul.f32 %v1317, %v1253
        %v1320 = vmul.f32 %v1317, %v1258
        %v1324 = vrot.slane %v1318, 4
        %v1325 = vrot.slane %v1319, 4
        %v1326 = vsel %vm352, %v1324, %v1325
        %v1327 = vrot.slane %v1320, 4
        %v1328 = vsel %vm352, %v1325, %v1327
        %v1331 = vadd.f32 %v1314, %v1326
        %v1332 = vadd.f32 %v1315, %v1328
        %s1333 = sld [smem:[#allocation7 + $0x54]]
        %v1334 = vstv %s1333
        %v1335 = vmul.f32 %v1334, %v1257
        %v1336 = vmul.f32 %v1334, %v1253
        %v1337 = vmul.f32 %v1334, %v1258
        %v1341 = vrot.slane %v1335, 5
        %v1342 = vrot.slane %v1336, 5
        %v1343 = vsel %vm275, %v1341, %v1342
        %v1344 = vrot.slane %v1337, 5
        %v1345 = vsel %vm275, %v1342, %v1344
        %v1348 = vadd.f32 %v1331, %v1343
        %v1349 = vadd.f32 %v1332, %v1345
        %s1350 = sld [smem:[#allocation7 + $0x5b]]
        %v1351 = vstv %s1350
        %v1352 = vmul.f32 %v1351, %v1257
        %v1353 = vmul.f32 %v1351, %v1253
        %v1354 = vmul.f32 %v1351, %v1258
        %v1358 = vrot.slane %v1352, 6
        %v1359 = vrot.slane %v1353, 6
        %v1360 = vsel %vm387, %v1358, %v1359
        %v1361 = vrot.slane %v1354, 6
        %v1362 = vsel %vm387, %v1359, %v1361
        %v1365 = vadd.f32 %v1348, %v1360
        %v1366 = vadd.f32 %v1349, %v1362
        %s1367 = sld [smem:[#allocation7 + $0x32]]
        %v1368 = vstv %s1367
        %v1369 = vmul.f32 %v1368, %v1257
        %v1370 = vmul.f32 %v1368, %v1253
        %1373 = vrot.lane.b32.xlu0 %v1369, 127
        %v1374 = vpop.permute.xlu0 %1373
        %1375 = vrot.lane.b32.xlu0 %v1370, 127
        %v1376 = vpop.permute.xlu0 %1375
        %v1379 = vadd.f32 %v1365, %v1374
        %v1380 = vadd.f32 %v1366, %v1376
        %s1381 = sld [smem:[#allocation7 + $0x39]]
        %v1382 = vstv %s1381
        %v1383 = vmul.f32 %v1382, %v1257
        %v1384 = vmul.f32 %v1382, %v1253
        %v1385 = vmul.f32 %v1382, %v1258
        %v1389 = vrot.slane %v1383, 1
        %v1390 = vrot.slane %v1384, 1
        %v1391 = vsel %vm298, %v1389, %v1390
        %v1392 = vrot.slane %v1385, 1
        %v1393 = vsel %vm298, %v1390, %v1392
        %1394 = vrot.lane.b32.xlu0 %v1391, 127
        %v1395 = vpop.permute.xlu0 %1394
        %1396 = vrot.lane.b32.xlu0 %v1393, 127
        %v1397 = vpop.permute.xlu0 %1396
        %v1400 = vadd.f32 %v1379, %v1395
        %v1401 = vadd.f32 %v1380, %v1397
        %s1402 = sld [smem:[#allocation7 + $0x40]]
        %v1403 = vstv %s1402
        %v1404 = vmul.f32 %v1403, %v1257
        %v1405 = vmul.f32 %v1403, %v1253
        %v1406 = vmul.f32 %v1403, %v1258
        %v1410 = vrot.slane %v1404, 2
        %v1411 = vrot.slane %v1405, 2
        %v1412 = vsel %vm316, %v1410, %v1411
        %v1413 = vrot.slane %v1406, 2
        %v1414 = vsel %vm316, %v1411, %v1413
        %1415 = vrot.lane.b32.xlu0 %v1412, 127
        %v1416 = vpop.permute.xlu0 %1415
        %1417 = vrot.lane.b32.xlu0 %v1414, 127
        %v1418 = vpop.permute.xlu0 %1417
        %v1421 = vadd.f32 %v1400, %v1416
        %v1422 = vadd.f32 %v1401, %v1418
        %s1423 = sld [smem:[#allocation7 + $0x47]]
        %v1424 = vstv %s1423
        %v1425 = vmul.f32 %v1424, %v1257
        %v1426 = vmul.f32 %v1424, %v1253
        %v1427 = vmul.f32 %v1424, %v1258
        %v1431 = vrot.slane %v1425, 3
        %v1432 = vrot.slane %v1426, 3
        %v1433 = vsel %vm334, %v1431, %v1432
        %v1434 = vrot.slane %v1427, 3
        %v1435 = vsel %vm334, %v1432, %v1434
        %1436 = vrot.lane.b32.xlu0 %v1433, 127
        %v1437 = vpop.permute.xlu0 %1436
        %1438 = vrot.lane.b32.xlu0 %v1435, 127
        %v1439 = vpop.permute.xlu0 %1438
        %v1442 = vadd.f32 %v1421, %v1437
        %v1443 = vadd.f32 %v1422, %v1439
        %s1444 = sld [smem:[#allocation7 + $0x4e]]
        %v1445 = vstv %s1444
        %v1446 = vmul.f32 %v1445, %v1257
        %v1447 = vmul.f32 %v1445, %v1253
        %v1448 = vmul.f32 %v1445, %v1258
        %v1452 = vrot.slane %v1446, 4
        %v1453 = vrot.slane %v1447, 4
        %v1454 = vsel %vm352, %v1452, %v1453
        %v1455 = vrot.slane %v1448, 4
        %v1456 = vsel %vm352, %v1453, %v1455
        %1457 = vrot.lane.b32.xlu0 %v1454, 127
        %v1458 = vpop.permute.xlu0 %1457
        %1459 = vrot.lane.b32.xlu0 %v1456, 127
        %v1460 = vpop.permute.xlu0 %1459
        %v1463 = vadd.f32 %v1442, %v1458
        %v1464 = vadd.f32 %v1443, %v1460
        %s1465 = sld [smem:[#allocation7 + $0x55]]
        %v1466 = vstv %s1465
        %v1467 = vmul.f32 %v1466, %v1257
        %v1468 = vmul.f32 %v1466, %v1253
        %v1469 = vmul.f32 %v1466, %v1258
        %v1473 = vrot.slane %v1467, 5
        %v1474 = vrot.slane %v1468, 5
        %v1475 = vsel %vm275, %v1473, %v1474
        %v1476 = vrot.slane %v1469, 5
        %v1477 = vsel %vm275, %v1474, %v1476
        %1478 = vrot.lane.b32.xlu0 %v1475, 127
        %v1479 = vpop.permute.xlu0 %1478
        %1480 = vrot.lane.b32.xlu0 %v1477, 127
        %v1481 = vpop.permute.xlu0 %1480
        %v1484 = vadd.f32 %v1463, %v1479
        %v1485 = vadd.f32 %v1464, %v1481
        %s1486 = sld [smem:[#allocation7 + $0x5c]]
        %v1487 = vstv %s1486
        %v1488 = vmul.f32 %v1487, %v1257
        %v1489 = vmul.f32 %v1487, %v1253
        %v1490 = vmul.f32 %v1487, %v1258
        %v1494 = vrot.slane %v1488, 6
        %v1495 = vrot.slane %v1489, 6
        %v1496 = vsel %vm387, %v1494, %v1495
        %v1497 = vrot.slane %v1490, 6
        %v1498 = vsel %vm387, %v1495, %v1497
        %1499 = vrot.lane.b32.xlu0 %v1496, 127
        %v1500 = vpop.permute.xlu0 %1499
        %1501 = vrot.lane.b32.xlu0 %v1498, 127
        %v1502 = vpop.permute.xlu0 %1501
        %v1505 = vadd.f32 %v1484, %v1500
        %v1506 = vadd.f32 %v1485, %v1502
        %s1507 = sld [smem:[#allocation7 + $0x33]]
        %v1508 = vstv %s1507
        %v1509 = vmul.f32 %v1508, %v1257
        %v1510 = vmul.f32 %v1508, %v1253
        %1513 = vrot.lane.b32.xlu0 %v1509, 126
        %v1514 = vpop.permute.xlu0 %1513
        %1515 = vrot.lane.b32.xlu0 %v1510, 126
        %v1516 = vpop.permute.xlu0 %1515
        %v1519 = vadd.f32 %v1505, %v1514
        %v1520 = vadd.f32 %v1506, %v1516
        %s1521 = sld [smem:[#allocation7 + $0x3a]]
        %v1522 = vstv %s1521
        %v1523 = vmul.f32 %v1522, %v1257
        %v1524 = vmul.f32 %v1522, %v1253
        %v1525 = vmul.f32 %v1522, %v1258
        %v1529 = vrot.slane %v1523, 1
        %v1530 = vrot.slane %v1524, 1
        %v1531 = vsel %vm298, %v1529, %v1530
        %v1532 = vrot.slane %v1525, 1
        %v1533 = vsel %vm298, %v1530, %v1532
        %1534 = vrot.lane.b32.xlu0 %v1531, 126
        %v1535 = vpop.permute.xlu0 %1534
        %1536 = vrot.lane.b32.xlu0 %v1533, 126
        %v1537 = vpop.permute.xlu0 %1536
        %v1540 = vadd.f32 %v1519, %v1535
        %v1541 = vadd.f32 %v1520, %v1537
        %s1542 = sld [smem:[#allocation7 + $0x41]]
        %v1543 = vstv %s1542
        %v1544 = vmul.f32 %v1543, %v1257
        %v1545 = vmul.f32 %v1543, %v1253
        %v1546 = vmul.f32 %v1543, %v1258
        %v1550 = vrot.slane %v1544, 2
        %v1551 = vrot.slane %v1545, 2
        %v1552 = vsel %vm316, %v1550, %v1551
        %v1553 = vrot.slane %v1546, 2
        %v1554 = vsel %vm316, %v1551, %v1553
        %1555 = vrot.lane.b32.xlu0 %v1552, 126
        %v1556 = vpop.permute.xlu0 %1555
        %1557 = vrot.lane.b32.xlu0 %v1554, 126
        %v1558 = vpop.permute.xlu0 %1557
        %v1561 = vadd.f32 %v1540, %v1556
        %v1562 = vadd.f32 %v1541, %v1558
        %s1563 = sld [smem:[#allocation7 + $0x48]]
        %v1564 = vstv %s1563
        %v1565 = vmul.f32 %v1564, %v1257
        %v1566 = vmul.f32 %v1564, %v1253
        %v1567 = vmul.f32 %v1564, %v1258
        %v1571 = vrot.slane %v1565, 3
        %v1572 = vrot.slane %v1566, 3
        %v1573 = vsel %vm334, %v1571, %v1572
        %v1574 = vrot.slane %v1567, 3
        %v1575 = vsel %vm334, %v1572, %v1574
        %1576 = vrot.lane.b32.xlu0 %v1573, 126
        %v1577 = vpop.permute.xlu0 %1576
        %1578 = vrot.lane.b32.xlu0 %v1575, 126
        %v1579 = vpop.permute.xlu0 %1578
        %v1582 = vadd.f32 %v1561, %v1577
        %v1583 = vadd.f32 %v1562, %v1579
        %s1584 = sld [smem:[#allocation7 + $0x4f]]
        %v1585 = vstv %s1584
        %v1586 = vmul.f32 %v1585, %v1257
        %v1587 = vmul.f32 %v1585, %v1253
        %v1588 = vmul.f32 %v1585, %v1258
        %v1592 = vrot.slane %v1586, 4
        %v1593 = vrot.slane %v1587, 4
        %v1594 = vsel %vm352, %v1592, %v1593
        %v1595 = vrot.slane %v1588, 4
        %v1596 = vsel %vm352, %v1593, %v1595
        %1597 = vrot.lane.b32.xlu0 %v1594, 126
        %v1598 = vpop.permute.xlu0 %1597
        %1599 = vrot.lane.b32.xlu0 %v1596, 126
        %v1600 = vpop.permute.xlu0 %1599
        %v1603 = vadd.f32 %v1582, %v1598
        %v1604 = vadd.f32 %v1583, %v1600
        %s1605 = sld [smem:[#allocation7 + $0x56]]
        %v1606 = vstv %s1605
        %v1607 = vmul.f32 %v1606, %v1257
        %v1608 = vmul.f32 %v1606, %v1253
        %v1609 = vmul.f32 %v1606, %v1258
        %v1613 = vrot.slane %v1607, 5
        %v1614 = vrot.slane %v1608, 5
        %v1615 = vsel %vm275, %v1613, %v1614
        %v1616 = vrot.slane %v1609, 5
        %v1617 = vsel %vm275, %v1614, %v1616
        %1618 = vrot.lane.b32.xlu0 %v1615, 126
        %v1619 = vpop.permute.xlu0 %1618
        %1620 = vrot.lane.b32.xlu0 %v1617, 126
        %v1621 = vpop.permute.xlu0 %1620
        %v1624 = vadd.f32 %v1603, %v1619
        %v1625 = vadd.f32 %v1604, %v1621
        %s1626 = sld [smem:[#allocation7 + $0x5d]]
        %v1627 = vstv %s1626
        %v1628 = vmul.f32 %v1627, %v1257
        %v1629 = vmul.f32 %v1627, %v1253
        %v1630 = vmul.f32 %v1627, %v1258
        %v1634 = vrot.slane %v1628, 6
        %v1635 = vrot.slane %v1629, 6
        %v1636 = vsel %vm387, %v1634, %v1635
        %v1637 = vrot.slane %v1630, 6
        %v1638 = vsel %vm387, %v1635, %v1637
        %1639 = vrot.lane.b32.xlu0 %v1636, 126
        %v1640 = vpop.permute.xlu0 %1639
        %1641 = vrot.lane.b32.xlu0 %v1638, 126
        %v1642 = vpop.permute.xlu0 %1641
        %v1645 = vadd.f32 %v1624, %v1640
        %v1646 = vadd.f32 %v1625, %v1642
        %s1647 = sld [smem:[#allocation7 + $0x34]]
        %v1648 = vstv %s1647
        %v1649 = vmul.f32 %v1648, %v1257
        %v1650 = vmul.f32 %v1648, %v1253
        %1653 = vrot.lane.b32.xlu0 %v1649, 125
        %v1654 = vpop.permute.xlu0 %1653
        %1655 = vrot.lane.b32.xlu0 %v1650, 125
        %v1656 = vpop.permute.xlu0 %1655
        %v1659 = vadd.f32 %v1645, %v1654
        %v1660 = vadd.f32 %v1646, %v1656
        %s1661 = sld [smem:[#allocation7 + $0x3b]]
        %v1662 = vstv %s1661
        %v1663 = vmul.f32 %v1662, %v1257
        %v1664 = vmul.f32 %v1662, %v1253
        %v1665 = vmul.f32 %v1662, %v1258
        %v1669 = vrot.slane %v1663, 1
        %v1670 = vrot.slane %v1664, 1
        %v1671 = vsel %vm298, %v1669, %v1670
        %v1672 = vrot.slane %v1665, 1
        %v1673 = vsel %vm298, %v1670, %v1672
        %1674 = vrot.lane.b32.xlu0 %v1671, 125
        %v1675 = vpop.permute.xlu0 %1674
        %1676 = vrot.lane.b32.xlu0 %v1673, 125
        %v1677 = vpop.permute.xlu0 %1676
        %v1680 = vadd.f32 %v1659, %v1675
        %v1681 = vadd.f32 %v1660, %v1677
        %s1682 = sld [smem:[#allocation7 + $0x42]]
        %v1683 = vstv %s1682
        %v1684 = vmul.f32 %v1683, %v1257
        %v1685 = vmul.f32 %v1683, %v1253
        %v1686 = vmul.f32 %v1683, %v1258
        %v1690 = vrot.slane %v1684, 2
        %v1691 = vrot.slane %v1685, 2
        %v1692 = vsel %vm316, %v1690, %v1691
        %v1693 = vrot.slane %v1686, 2
        %v1694 = vsel %vm316, %v1691, %v1693
        %1695 = vrot.lane.b32.xlu0 %v1692, 125
        %v1696 = vpop.permute.xlu0 %1695
        %1697 = vrot.lane.b32.xlu0 %v1694, 125
        %v1698 = vpop.permute.xlu0 %1697
        %v1701 = vadd.f32 %v1680, %v1696
        %v1702 = vadd.f32 %v1681, %v1698
        %s1703 = sld [smem:[#allocation7 + $0x49]]
        %v1704 = vstv %s1703
        %v1705 = vmul.f32 %v1704, %v1257
        %v1706 = vmul.f32 %v1704, %v1253
        %v1707 = vmul.f32 %v1704, %v1258
        %v1711 = vrot.slane %v1705, 3
        %v1712 = vrot.slane %v1706, 3
        %v1713 = vsel %vm334, %v1711, %v1712
        %v1714 = vrot.slane %v1707, 3
        %v1715 = vsel %vm334, %v1712, %v1714
        %1716 = vrot.lane.b32.xlu0 %v1713, 125
        %v1717 = vpop.permute.xlu0 %1716
        %1718 = vrot.lane.b32.xlu0 %v1715, 125
        %v1719 = vpop.permute.xlu0 %1718
        %v1722 = vadd.f32 %v1701, %v1717
        %v1723 = vadd.f32 %v1702, %v1719
        %s1724 = sld [smem:[#allocation7 + $0x50]]
        %v1725 = vstv %s1724
        %v1726 = vmul.f32 %v1725, %v1257
        %v1727 = vmul.f32 %v1725, %v1253
        %v1728 = vmul.f32 %v1725, %v1258
        %v1732 = vrot.slane %v1726, 4
        %v1733 = vrot.slane %v1727, 4
        %v1734 = vsel %vm352, %v1732, %v1733
        %v1735 = vrot.slane %v1728, 4
        %v1736 = vsel %vm352, %v1733, %v1735
        %1737 = vrot.lane.b32.xlu0 %v1734, 125
        %v1738 = vpop.permute.xlu0 %1737
        %1739 = vrot.lane.b32.xlu0 %v1736, 125
        %v1740 = vpop.permute.xlu0 %1739
        %v1743 = vadd.f32 %v1722, %v1738
        %v1744 = vadd.f32 %v1723, %v1740
        %s1745 = sld [smem:[#allocation7 + $0x57]]
        %v1746 = vstv %s1745
        %v1747 = vmul.f32 %v1746, %v1257
        %v1748 = vmul.f32 %v1746, %v1253
        %v1749 = vmul.f32 %v1746, %v1258
        %v1753 = vrot.slane %v1747, 5
        %v1754 = vrot.slane %v1748, 5
        %v1755 = vsel %vm275, %v1753, %v1754
        %v1756 = vrot.slane %v1749, 5
        %v1757 = vsel %vm275, %v1754, %v1756
        %1758 = vrot.lane.b32.xlu0 %v1755, 125
        %v1759 = vpop.permute.xlu0 %1758
        %1760 = vrot.lane.b32.xlu0 %v1757, 125
        %v1761 = vpop.permute.xlu0 %1760
        %v1764 = vadd.f32 %v1743, %v1759
        %v1765 = vadd.f32 %v1744, %v1761
        %s1766 = sld [smem:[#allocation7 + $0x5e]]
        %v1767 = vstv %s1766
        %v1768 = vmul.f32 %v1767, %v1257
        %v1769 = vmul.f32 %v1767, %v1253
        %v1770 = vmul.f32 %v1767, %v1258
        %v1774 = vrot.slane %v1768, 6
        %v1775 = vrot.slane %v1769, 6
        %v1776 = vsel %vm387, %v1774, %v1775
        %v1777 = vrot.slane %v1770, 6
        %v1778 = vsel %vm387, %v1775, %v1777
        %1779 = vrot.lane.b32.xlu0 %v1776, 125
        %v1780 = vpop.permute.xlu0 %1779
        %1781 = vrot.lane.b32.xlu0 %v1778, 125
        %v1782 = vpop.permute.xlu0 %1781
        %v1785 = vadd.f32 %v1764, %v1780
        %v1786 = vadd.f32 %v1765, %v1782
        %s1787 = sld [smem:[#allocation7 + $0x35]]
        %v1788 = vstv %s1787
        %v1789 = vmul.f32 %v1788, %v1257
        %v1790 = vmul.f32 %v1788, %v1253
        %1793 = vrot.lane.b32.xlu0 %v1789, 124
        %v1794 = vpop.permute.xlu0 %1793
        %1795 = vrot.lane.b32.xlu0 %v1790, 124
        %v1796 = vpop.permute.xlu0 %1795
        %v1799 = vadd.f32 %v1785, %v1794
        %v1800 = vadd.f32 %v1786, %v1796
        %s1801 = sld [smem:[#allocation7 + $0x3c]]
        %v1802 = vstv %s1801
        %v1803 = vmul.f32 %v1802, %v1257
        %v1804 = vmul.f32 %v1802, %v1253
        %v1805 = vmul.f32 %v1802, %v1258
        %v1809 = vrot.slane %v1803, 1
        %v1810 = vrot.slane %v1804, 1
        %v1811 = vsel %vm298, %v1809, %v1810
        %v1812 = vrot.slane %v1805, 1
        %v1813 = vsel %vm298, %v1810, %v1812
        %1814 = vrot.lane.b32.xlu0 %v1811, 124
        %v1815 = vpop.permute.xlu0 %1814
        %1816 = vrot.lane.b32.xlu0 %v1813, 124
        %v1817 = vpop.permute.xlu0 %1816
        %v1820 = vadd.f32 %v1799, %v1815
        %v1821 = vadd.f32 %v1800, %v1817
        %s1822 = sld [smem:[#allocation7 + $0x43]]
        %v1823 = vstv %s1822
        %v1824 = vmul.f32 %v1823, %v1257
        %v1825 = vmul.f32 %v1823, %v1253
        %v1826 = vmul.f32 %v1823, %v1258
        %v1830 = vrot.slane %v1824, 2
        %v1831 = vrot.slane %v1825, 2
        %v1832 = vsel %vm316, %v1830, %v1831
        %v1833 = vrot.slane %v1826, 2
        %v1834 = vsel %vm316, %v1831, %v1833
        %1835 = vrot.lane.b32.xlu0 %v1832, 124
        %v1836 = vpop.permute.xlu0 %1835
        %1837 = vrot.lane.b32.xlu0 %v1834, 124
        %v1838 = vpop.permute.xlu0 %1837
        %v1841 = vadd.f32 %v1820, %v1836
        %v1842 = vadd.f32 %v1821, %v1838
        %s1843 = sld [smem:[#allocation7 + $0x4a]]
        %v1844 = vstv %s1843
        %v1845 = vmul.f32 %v1844, %v1257
        %v1846 = vmul.f32 %v1844, %v1253
        %v1847 = vmul.f32 %v1844, %v1258
        %v1851 = vrot.slane %v1845, 3
        %v1852 = vrot.slane %v1846, 3
        %v1853 = vsel %vm334, %v1851, %v1852
        %v1854 = vrot.slane %v1847, 3
        %v1855 = vsel %vm334, %v1852, %v1854
        %1856 = vrot.lane.b32.xlu0 %v1853, 124
        %v1857 = vpop.permute.xlu0 %1856
        %1858 = vrot.lane.b32.xlu0 %v1855, 124
        %v1859 = vpop.permute.xlu0 %1858
        %v1862 = vadd.f32 %v1841, %v1857
        %v1863 = vadd.f32 %v1842, %v1859
        %s1864 = sld [smem:[#allocation7 + $0x51]]
        %v1865 = vstv %s1864
        %v1866 = vmul.f32 %v1865, %v1257
        %v1867 = vmul.f32 %v1865, %v1253
        %v1868 = vmul.f32 %v1865, %v1258
        %v1872 = vrot.slane %v1866, 4
        %v1873 = vrot.slane %v1867, 4
        %v1874 = vsel %vm352, %v1872, %v1873
        %v1875 = vrot.slane %v1868, 4
        %v1876 = vsel %vm352, %v1873, %v1875
        %1877 = vrot.lane.b32.xlu0 %v1874, 124
        %v1878 = vpop.permute.xlu0 %1877
        %1879 = vrot.lane.b32.xlu0 %v1876, 124
        %v1880 = vpop.permute.xlu0 %1879
        %v1883 = vadd.f32 %v1862, %v1878
        %v1884 = vadd.f32 %v1863, %v1880
        %s1885 = sld [smem:[#allocation7 + $0x58]]
        %v1886 = vstv %s1885
        %v1887 = vmul.f32 %v1886, %v1257
        %v1888 = vmul.f32 %v1886, %v1253
        %v1889 = vmul.f32 %v1886, %v1258
        %v1893 = vrot.slane %v1887, 5
        %v1894 = vrot.slane %v1888, 5
        %v1895 = vsel %vm275, %v1893, %v1894
        %v1896 = vrot.slane %v1889, 5
        %v1897 = vsel %vm275, %v1894, %v1896
        %1898 = vrot.lane.b32.xlu0 %v1895, 124
        %v1899 = vpop.permute.xlu0 %1898
        %1900 = vrot.lane.b32.xlu0 %v1897, 124
        %v1901 = vpop.permute.xlu0 %1900
        %v1904 = vadd.f32 %v1883, %v1899
        %v1905 = vadd.f32 %v1884, %v1901
        %s1906 = sld [smem:[#allocation7 + $0x5f]]
        %v1907 = vstv %s1906
        %v1908 = vmul.f32 %v1907, %v1257
        %v1909 = vmul.f32 %v1907, %v1253
        %v1910 = vmul.f32 %v1907, %v1258
        %v1914 = vrot.slane %v1908, 6
        %v1915 = vrot.slane %v1909, 6
        %v1916 = vsel %vm387, %v1914, %v1915
        %v1917 = vrot.slane %v1910, 6
        %v1918 = vsel %vm387, %v1915, %v1917
        %1919 = vrot.lane.b32.xlu0 %v1916, 124
        %v1920 = vpop.permute.xlu0 %1919
        %1921 = vrot.lane.b32.xlu0 %v1918, 124
        %v1922 = vpop.permute.xlu0 %1921
        %v1925 = vadd.f32 %v1904, %v1920
        %v1926 = vadd.f32 %v1905, %v1922
        %s1927 = sld [smem:[#allocation7 + $0x36]]
        %v1928 = vstv %s1927
        %v1929 = vmul.f32 %v1928, %v1257
        %v1930 = vmul.f32 %v1928, %v1253
        %1933 = vrot.lane.b32.xlu0 %v1929, 123
        %v1934 = vpop.permute.xlu0 %1933
        %1935 = vrot.lane.b32.xlu0 %v1930, 123
        %v1936 = vpop.permute.xlu0 %1935
        %v1939 = vadd.f32 %v1925, %v1934
        %v1940 = vadd.f32 %v1926, %v1936
        %s1941 = sld [smem:[#allocation7 + $0x3d]]
        %v1942 = vstv %s1941
        %v1943 = vmul.f32 %v1942, %v1257
        %v1944 = vmul.f32 %v1942, %v1253
        %v1945 = vmul.f32 %v1942, %v1258
        %v1949 = vrot.slane %v1943, 1
        %v1950 = vrot.slane %v1944, 1
        %v1951 = vsel %vm298, %v1949, %v1950
        %v1952 = vrot.slane %v1945, 1
        %v1953 = vsel %vm298, %v1950, %v1952
        %1954 = vrot.lane.b32.xlu0 %v1951, 123
        %v1955 = vpop.permute.xlu0 %1954
        %1956 = vrot.lane.b32.xlu0 %v1953, 123
        %v1957 = vpop.permute.xlu0 %1956
        %v1960 = vadd.f32 %v1939, %v1955
        %v1961 = vadd.f32 %v1940, %v1957
        %s1962 = sld [smem:[#allocation7 + $0x44]]
        %v1963 = vstv %s1962
        %v1964 = vmul.f32 %v1963, %v1257
        %v1965 = vmul.f32 %v1963, %v1253
        %v1966 = vmul.f32 %v1963, %v1258
        %v1970 = vrot.slane %v1964, 2
        %v1971 = vrot.slane %v1965, 2
        %v1972 = vsel %vm316, %v1970, %v1971
        %v1973 = vrot.slane %v1966, 2
        %v1974 = vsel %vm316, %v1971, %v1973
        %1975 = vrot.lane.b32.xlu0 %v1972, 123
        %v1976 = vpop.permute.xlu0 %1975
        %1977 = vrot.lane.b32.xlu0 %v1974, 123
        %v1978 = vpop.permute.xlu0 %1977
        %v1981 = vadd.f32 %v1960, %v1976
        %v1982 = vadd.f32 %v1961, %v1978
        %s1983 = sld [smem:[#allocation7 + $0x4b]]
        %v1984 = vstv %s1983
        %v1985 = vmul.f32 %v1984, %v1257
        %v1986 = vmul.f32 %v1984, %v1253
        %v1987 = vmul.f32 %v1984, %v1258
        %v1991 = vrot.slane %v1985, 3
        %v1992 = vrot.slane %v1986, 3
        %v1993 = vsel %vm334, %v1991, %v1992
        %v1994 = vrot.slane %v1987, 3
        %v1995 = vsel %vm334, %v1992, %v1994
        %1996 = vrot.lane.b32.xlu0 %v1993, 123
        %v1997 = vpop.permute.xlu0 %1996
        %1998 = vrot.lane.b32.xlu0 %v1995, 123
        %v1999 = vpop.permute.xlu0 %1998
        %v2002 = vadd.f32 %v1981, %v1997
        %v2003 = vadd.f32 %v1982, %v1999
        %s2004 = sld [smem:[#allocation7 + $0x52]]
        %v2005 = vstv %s2004
        %v2006 = vmul.f32 %v2005, %v1257
        %v2007 = vmul.f32 %v2005, %v1253
        %v2008 = vmul.f32 %v2005, %v1258
        %v2012 = vrot.slane %v2006, 4
        %v2013 = vrot.slane %v2007, 4
        %v2014 = vsel %vm352, %v2012, %v2013
        %v2015 = vrot.slane %v2008, 4
        %v2016 = vsel %vm352, %v2013, %v2015
        %2017 = vrot.lane.b32.xlu0 %v2014, 123
        %v2018 = vpop.permute.xlu0 %2017
        %2019 = vrot.lane.b32.xlu0 %v2016, 123
        %v2020 = vpop.permute.xlu0 %2019
        %v2023 = vadd.f32 %v2002, %v2018
        %v2024 = vadd.f32 %v2003, %v2020
        %s2025 = sld [smem:[#allocation7 + $0x59]]
        %v2026 = vstv %s2025
        %v2027 = vmul.f32 %v2026, %v1257
        %v2028 = vmul.f32 %v2026, %v1253
        %v2029 = vmul.f32 %v2026, %v1258
        %v2033 = vrot.slane %v2027, 5
        %v2034 = vrot.slane %v2028, 5
        %v2035 = vsel %vm275, %v2033, %v2034
        %v2036 = vrot.slane %v2029, 5
        %v2037 = vsel %vm275, %v2034, %v2036
        %2038 = vrot.lane.b32.xlu0 %v2035, 123
        %v2039 = vpop.permute.xlu0 %2038
        %2040 = vrot.lane.b32.xlu0 %v2037, 123
        %v2041 = vpop.permute.xlu0 %2040
        %v2044 = vadd.f32 %v2023, %v2039
        %v2045 = vadd.f32 %v2024, %v2041
        %s2046 = sld [smem:[#allocation7 + $0x60]]
        %v2047 = vstv %s2046
        %v2048 = vmul.f32 %v2047, %v1257
        %v2049 = vmul.f32 %v2047, %v1253
        %v2050 = vmul.f32 %v2047, %v1258
        %v2054 = vrot.slane %v2048, 6
        %v2055 = vrot.slane %v2049, 6
        %v2056 = vsel %vm387, %v2054, %v2055
        %v2057 = vrot.slane %v2050, 6
        %v2058 = vsel %vm387, %v2055, %v2057
        %2059 = vrot.lane.b32.xlu0 %v2056, 123
        %v2060 = vpop.permute.xlu0 %2059
        %2061 = vrot.lane.b32.xlu0 %v2058, 123
        %v2062 = vpop.permute.xlu0 %2061
        %v2065 = vadd.f32 %v2044, %v2060
        %v2066 = vadd.f32 %v2045, %v2062
        %s2067 = sld [smem:[#allocation7 + $0x37]]
        %v2068 = vstv %s2067
        %v2069 = vmul.f32 %v2068, %v1257
        %v2070 = vmul.f32 %v2068, %v1253
        %2073 = vrot.lane.b32.xlu0 %v2069, 122
        %v2074 = vpop.permute.xlu0 %2073
        %2075 = vrot.lane.b32.xlu0 %v2070, 122
        %v2076 = vpop.permute.xlu0 %2075
        %v2079 = vadd.f32 %v2065, %v2074
        %v2080 = vadd.f32 %v2066, %v2076
        %s2081 = sld [smem:[#allocation7 + $0x3e]]
        %v2082 = vstv %s2081
        %v2083 = vmul.f32 %v2082, %v1257
        %v2084 = vmul.f32 %v2082, %v1253
        %v2085 = vmul.f32 %v2082, %v1258
        %v2089 = vrot.slane %v2083, 1
        %v2090 = vrot.slane %v2084, 1
        %v2091 = vsel %vm298, %v2089, %v2090
        %v2092 = vrot.slane %v2085, 1
        %v2093 = vsel %vm298, %v2090, %v2092
        %2094 = vrot.lane.b32.xlu0 %v2091, 122
        %v2095 = vpop.permute.xlu0 %2094
        %2096 = vrot.lane.b32.xlu0 %v2093, 122
        %v2097 = vpop.permute.xlu0 %2096
        %v2100 = vadd.f32 %v2079, %v2095
        %v2101 = vadd.f32 %v2080, %v2097
        %s2102 = sld [smem:[#allocation7 + $0x45]]
        %v2103 = vstv %s2102
        %v2104 = vmul.f32 %v2103, %v1257
        %v2105 = vmul.f32 %v2103, %v1253
        %v2106 = vmul.f32 %v2103, %v1258
        %v2110 = vrot.slane %v2104, 2
        %v2111 = vrot.slane %v2105, 2
        %v2112 = vsel %vm316, %v2110, %v2111
        %v2113 = vrot.slane %v2106, 2
        %v2114 = vsel %vm316, %v2111, %v2113
        %2115 = vrot.lane.b32.xlu0 %v2112, 122
        %v2116 = vpop.permute.xlu0 %2115
        %2117 = vrot.lane.b32.xlu0 %v2114, 122
        %v2118 = vpop.permute.xlu0 %2117
        %v2121 = vadd.f32 %v2100, %v2116
        %v2122 = vadd.f32 %v2101, %v2118
        %s2123 = sld [smem:[#allocation7 + $0x4c]]
        %v2124 = vstv %s2123
        %v2125 = vmul.f32 %v2124, %v1257
        %v2126 = vmul.f32 %v2124, %v1253
        %v2127 = vmul.f32 %v2124, %v1258
        %v2131 = vrot.slane %v2125, 3
        %v2132 = vrot.slane %v2126, 3
        %v2133 = vsel %vm334, %v2131, %v2132
        %v2134 = vrot.slane %v2127, 3
        %v2135 = vsel %vm334, %v2132, %v2134
        %2136 = vrot.lane.b32.xlu0 %v2133, 122
        %v2137 = vpop.permute.xlu0 %2136
        %2138 = vrot.lane.b32.xlu0 %v2135, 122
        %v2139 = vpop.permute.xlu0 %2138
        %v2142 = vadd.f32 %v2121, %v2137
        %v2143 = vadd.f32 %v2122, %v2139
        %s2144 = sld [smem:[#allocation7 + $0x53]]
        %v2145 = vstv %s2144
        %v2146 = vmul.f32 %v2145, %v1257
        %v2147 = vmul.f32 %v2145, %v1253
        %v2148 = vmul.f32 %v2145, %v1258
        %v2152 = vrot.slane %v2146, 4
        %v2153 = vrot.slane %v2147, 4
        %v2154 = vsel %vm352, %v2152, %v2153
        %v2155 = vrot.slane %v2148, 4
        %v2156 = vsel %vm352, %v2153, %v2155
        %2157 = vrot.lane.b32.xlu0 %v2154, 122
        %v2158 = vpop.permute.xlu0 %2157
        %2159 = vrot.lane.b32.xlu0 %v2156, 122
        %v2160 = vpop.permute.xlu0 %2159
        %v2163 = vadd.f32 %v2142, %v2158
        %v2164 = vadd.f32 %v2143, %v2160
        %s2165 = sld [smem:[#allocation7 + $0x5a]]
        %v2166 = vstv %s2165
        %v2167 = vmul.f32 %v2166, %v1257
        %v2168 = vmul.f32 %v2166, %v1253
        %v2169 = vmul.f32 %v2166, %v1258
        %v2173 = vrot.slane %v2167, 5
        %v2174 = vrot.slane %v2168, 5
        %v2175 = vsel %vm275, %v2173, %v2174
        %v2176 = vrot.slane %v2169, 5
        %v2177 = vsel %vm275, %v2174, %v2176
        %2178 = vrot.lane.b32.xlu0 %v2175, 122
        %v2179 = vpop.permute.xlu0 %2178
        %2180 = vrot.lane.b32.xlu0 %v2177, 122
        %v2181 = vpop.permute.xlu0 %2180
        %v2184 = vadd.f32 %v2163, %v2179
        %v2185 = vadd.f32 %v2164, %v2181
        %s2186 = sld [smem:[#allocation7 + $0x61]]
        %v2187 = vstv %s2186
        %v2188 = vmul.f32 %v2187, %v1257
        %v2189 = vmul.f32 %v2187, %v1253
        %v2190 = vmul.f32 %v2187, %v1258
        %v2194 = vrot.slane %v2188, 6
        %v2195 = vrot.slane %v2189, 6
        %v2196 = vsel %vm387, %v2194, %v2195
        %v2197 = vrot.slane %v2190, 6
        %v2198 = vsel %vm387, %v2195, %v2197
        %2199 = vrot.lane.b32.xlu0 %v2196, 122
        %v2200 = vpop.permute.xlu0 %2199
        %2201 = vrot.lane.b32.xlu0 %v2198, 122
        %v2202 = vpop.permute.xlu0 %2201
        %v2205 = vadd.f32 %v2184, %v2200
        %v2206 = vadd.f32 %v2185, %v2202
        %v2207 = vstv %s257
        %v2208 = vmul.f32 %v2205, %v2207
        %v2209 = vmul.f32 %v2206, %v2207
        %v2210 = vstv %s258
        %v2211 = vadd.f32 %v2208, %v2210
        %v2212 = vadd.f32 %v2209, %v2210
        %v2213 = vxor.u32 %v2211, 2147483648
        %v2214 = vxor.u32 %v2212, 2147483648
        %v2215 = vmul.f32 %v2213, 1.442695
        %v2216 = vpow.pop %v2215
        %v2217 = vmul.f32 %v2214, 1.442695
        %v2218 = vpow.pop %v2217
        %v2219 = vadd.f32 %v2216, 1.0
        %v2220 = vadd.f32 %v2218, 1.0
        %v2221 = vrcp.pop %v2219
        %v2222 = vmul.f32 %v2219, %v2221
        %v2223 = vsub.f32 1.0, %v2222
        %v2224 = vmul.f32 %v2221, %v2223
        %v2225 = vadd.f32 %v2221, %v2224
        %vm2226 = vweird.f32 %v2219
        %vm2227 = vweird.f32 %v2221
        %vm2228 = vmor %vm2226, %vm2227
        %v2229 = vsel %vm2228, %v2221, %v2225
        %v2230 = vand.u32 2147483647, %v2219
        %vm2231 = vcmp.eq.f32.partialorder %v2230, 8.507059e+37
        %v2232 = vand.u32 %v2219, 2147483648
        %v2233 = vor.u32 1.1754944e-38, %v2232
        %v2234 = vsel %vm2231, %v2233, %v2229
        %v2235 = vmul.f32 1.0, %v2234
        %v2236 = vrcp.pop %v2220
        %v2237 = vmul.f32 %v2220, %v2236
        %v2238 = vsub.f32 1.0, %v2237
        %v2239 = vmul.f32 %v2236, %v2238
        %v2240 = vadd.f32 %v2236, %v2239
        %vm2241 = vweird.f32 %v2220
        %vm2242 = vweird.f32 %v2236
        %vm2243 = vmor %vm2241, %vm2242
        %v2244 = vsel %vm2243, %v2236, %v2240
        %v2245 = vand.u32 2147483647, %v2220
        %vm2246 = vcmp.eq.f32.partialorder %v2245, 8.507059e+37
        %v2247 = vand.u32 %v2220, 2147483648
        %v2248 = vor.u32 1.1754944e-38, %v2247
        %v2249 = vsel %vm2246, %v2248, %v2244
        %v2250 = vmul.f32 1.0, %v2249
        %v2251 = vmul.f32 %v2211, %v2235
        %v2252 = vmul.f32 %v2212, %v2250
        %2253 = vst.msk [vmem:[%s217] sm:$0xff] %vm226, %v2251
        %2254 = vst.msk [vmem:[%s217 + $0x8] sm:$0xff] %vm226, %v2252
        %s2255 = sand.u32 %s98, 1
        %s2256 = scalar_lea.sflag [#allocation4], %s2255
        %s2257 = sand.u32 %s98, 1
        %s2258 = smul.addr %s2257, 16
        %s2259 = scalar_lea.vmem [#allocation9], %s2258
        // Predicated region
        $region45: #{tpu_custom_call.1} parent=31 // pred_check
          %p2260 = pneg %p108
        $region46: #{tpu_custom_call.1} parent=31 // pred_check_branch
          %2262 = sbr.rel (%p2260) target = $region48
        $region47: #{tpu_custom_call.1} parent=31 // pred_region
          %2264 = vsyncadd %s2256, 0
          %s2265 = smul.addr %s22, 2
          %s2266 = smul.addr %s2265, 8
          %s2267 = scalar_lea.hbm %s3, %s2266
          %s2268 = sshll.u32 %s2259, 4
          %s2269 = int_to_ptr.vmem [resolvable:$true] %s2268
          %s2270 = sshll.u32 %s2267, 4
          %s2271 = int_to_ptr.hbm [resolvable:$true] %s2270
          %2276 = dma.vmem_to_hbm [thread:$0]  %s2269, 256, %s2271, %s2256, 128, 128, 8
        $region48: #{tpu_custom_call.1} parent=31 // pred_fallthru
          _
      $region32: #{tpu_custom_call.1} parent=5 // pred_fallthru
        _
      %p2277 = scmp.le.s32.totalorder 2, %s17
      // Predicated region
      $region49: #{tpu_custom_call.1} parent=5 // pred_check
        %p2278 = pneg %p2277
      $region50: #{tpu_custom_call.1} parent=5 // pred_check_branch
        %2280 = sbr.rel (%p2278) target = $region52
      $region51: #{tpu_custom_call.1} parent=5 // pred_region
        %s2281 = ssub.s32 %s17, 2
        // Predicated region
        $region53: #{tpu_custom_call.1} parent=51 // pred_check
          %p2282 = pneg %p114
        $region54: #{tpu_custom_call.1} parent=51 // pred_check_branch
          %2284 = sbr.rel (%p2282) target = $region56
        $region55: #{tpu_custom_call.1} parent=51 // pred_region
          %s2285 = sand.u32 %s99, 1
          %s2286 = scalar_lea.sflag [#allocation4], %s2285
          %s2287 = sand.u32 %s99, 1
          %s2288 = smul.addr %s2287, 16
          %s2289 = scalar_lea.vmem [#allocation9], %s2288
          %2291 = dma.done %s2286, 256
        $region56: #{tpu_custom_call.1} parent=51 // pred_fallthru
          _
      $region52: #{tpu_custom_call.1} parent=5 // pred_fallthru
        _
    $region6: #{tpu_custom_call.1} parent=1 // loop_footer
      %s21 = sadd.s32 1, %s17
    $region7: #{tpu_custom_call.1} parent=1 // loop_footer_branch
      %16 = sbr.rel target = $region3
    $region8: #{tpu_custom_call.1} parent=1 // loop_exit
      _
    %2292 = vsyncpa [#allocation3], 1
    %s2293 = scalar_lea.sflag [#allocation3], 1
    %2294 = vsyncpa %s2293, 1
    %2295 = vsyncpa [#allocation4], 1
    %s2296 = scalar_lea.sflag [#allocation4], 1
    %2297 = vsyncpa %s2296, 1
    %2298 = vsyncpa [#allocation5], 1
    %s2299 = scalar_lea.sflag [#allocation5], 1
    %2300 = vsyncpa %s2299, 1
    %2301 = vsyncpa [#allocation6], 1
    %s2302 = scalar_lea.sflag [#allocation6], 1
    %2303 = vsyncpa %s2302, 1

</llo_original>
